<compile_context>
chip_gen: v7x
topology: tpu7x:2x2x1
jax: 0.10.0
libtpu: 0.0.40
codegen_flags: <defaults>
</compile_context>

<pallas_src>
import math
import functools

import jax
import jax.numpy as jnp
import numpy as np
from jax.experimental import pallas as pl
from jax.experimental.pallas import tpu as pltpu


def _pick(n, prefs):
    """First preferred tile that evenly divides n, else the full extent."""
    for cand in prefs:
        if n % cand == 0:
            return cand
    return n


def _vmem_limit_bytes():
    """Generation-aware VMEM limit: ~cap - headroom, capped at 100 MiB."""
    cap = 64 * 1024 * 1024  # conservative fallback (safe on every generation)
    try:
        cap = int(pltpu.get_tpu_info().vmem_capacity_bytes)
    except Exception:
        pass
    return max(32 * 1024 * 1024, min(cap - 8 * 1024 * 1024, 100 * 1024 * 1024))


# --------------------------------------------------------------------------------------
# Kernel A: K/V projection, chunked over T by the grid.
# --------------------------------------------------------------------------------------
def kv_proj_kernel(x_ref, wkv_ref, bkv_ref, k_ref, v_ref, *, num_heads, head_dim):
    tkv, D = x_ref.shape[1], x_ref.shape[2]
    H, hd = num_heads, head_dim
    x = x_ref[0]                                                                # (tkv, D) bf16
    kv = jnp.dot(x, wkv_ref[...], preferred_element_type=jnp.float32)           # (tkv, 2D) f32
    kv = kv + bkv_ref[...]
    k = kv[:, :D].reshape(tkv, H, hd)
    v = kv[:, D:].reshape(tkv, H, hd)
    # K lane-dense along T (contraction-ready layout for QK^T), V in (H, T, hd) for P@V.
    k_ref[0] = jnp.transpose(k, (1, 2, 0)).astype(jnp.bfloat16)                 # (H, hd, tkv)
    v_ref[0] = jnp.transpose(v, (1, 0, 2)).astype(jnp.bfloat16)                 # (H, tkv, hd)


# --------------------------------------------------------------------------------------
# Kernel B: per (batch, query-block) encoder layer (attention + FFN + 2x LN + residuals).
# --------------------------------------------------------------------------------------
def encoder_block_kernel(
    xq_ref, k_ref, v_ref,
    wq_ref, bq_ref, wo_ref, bo_ref,
    g1_ref, be1_ref,
    w1_ref, b1_ref, w2_ref, b2_ref,
    g2_ref, be2_ref,
    o_ref,
    *, num_heads, head_dim, kv_chunk, ff_chunk, eps,
):
    tq, D = xq_ref.shape[1], xq_ref.shape[2]
    H, hd = num_heads, head_dim
    T = k_ref.shape[3]
    FF = w1_ref.shape[1]
    tk = kv_chunk
    nk = T // tk
    nf = FF // ff_chunk

    x_res = xq_ref[0].astype(jnp.float32)                                       # (tq, D) residual

    # ---- Q projection (1/sqrt(hd) folded into wq/bq by the wrapper) ----
    q = jnp.dot(x_res.astype(jnp.bfloat16), wq_ref[...],
                preferred_element_type=jnp.float32) + bq_ref[...]               # (tq, D) f32
    qh = jnp.transpose(q.reshape(tq, H, hd), (1, 0, 2)).astype(jnp.bfloat16)    # (H, tq, hd)

    # ---- head-batched attention with online (flash) softmax over K/V chunks ----
    def attn_step(kj, vj, m, l, acc):
        # kj: (H, hd, tk) bf16 (lane-dense along T), vj: (H, tk, hd) bf16
        s = jnp.einsum("hqd,hdk->hqk", qh, kj,
                       preferred_element_type=jnp.float32)                       # (H, tq, tk)
        m_new = jnp.maximum(m, jnp.max(s, axis=-1, keepdims=True))
        alpha = jnp.exp(m - m_new)
        p = jnp.exp(s - m_new)
        l = alpha * l + jnp.sum(p, axis=-1, keepdims=True)
        acc = alpha * acc + jnp.einsum("hqk,hkd->hqd", p.astype(jnp.bfloat16), vj,
                                       preferred_element_type=jnp.float32)
        return m_new, l, acc

    m0 = jnp.full((H, tq, 1), -jnp.inf, jnp.float32)
    l0 = jnp.zeros((H, tq, 1), jnp.float32)
    a0 = jnp.zeros((H, tq, hd), jnp.float32)
    if nk <= 4:
        # Small chunk count: fully static (unrolled) loop, static slices.
        m, l, acc = m0, l0, a0
        for j in range(nk):
            kj = k_ref[0, :, :, j * tk:(j + 1) * tk]
            vj = v_ref[0, :, j * tk:(j + 1) * tk, :]
            m, l, acc = attn_step(kj, vj, m, l, acc)
    else:
        def body(j, carry):
            m, l, acc = carry
            start = pl.multiple_of(j * tk, tk)
            kj = k_ref[0, :, :, pl.ds(start, tk)]
            vj = v_ref[0, :, pl.ds(start, tk), :]
            return attn_step(kj, vj, m, l, acc)
        m, l, acc = jax.lax.fori_loop(0, nk, body, (m0, l0, a0))

    ctx = acc * pl.reciprocal(l, approx=True)                                    # (H, tq, hd) f32
    attn = jnp.transpose(ctx, (1, 0, 2)).reshape(tq, D)                          # (tq, D) f32

    # ---- output projection + residual + LayerNorm 1 (f32) ----
    proj = jnp.dot(attn.astype(jnp.bfloat16), wo_ref[...],
                   preferred_element_type=jnp.float32) + bo_ref[...]
    y = x_res + proj
    mu = jnp.mean(y, axis=-1, keepdims=True)
    var = jnp.mean(jnp.square(y - mu), axis=-1, keepdims=True)
    y = (y - mu) * jax.lax.rsqrt(var + eps) * g1_ref[...] + be1_ref[...]
    y_bf = y.astype(jnp.bfloat16)

    # ---- feed-forward (ReLU), tiled over the FF dimension ----
    def ffn_step(w1j, b1j, w2j, acc2):
        h = jnp.dot(y_bf, w1j, preferred_element_type=jnp.float32) + b1j         # (tq, ffc)
        h = jnp.maximum(h, 0.0)
        return acc2 + jnp.dot(h.astype(jnp.bfloat16), w2j,
                              preferred_element_type=jnp.float32)                # (tq, D)

    acc2_0 = jnp.zeros((tq, D), jnp.float32)
    if nf <= 4:
        acc2 = acc2_0
        for j in range(nf):
            sl = slice(j * ff_chunk, (j + 1) * ff_chunk)
            acc2 = ffn_step(w1_ref[:, sl], b1_ref[:, sl], w2_ref[sl, :], acc2)
    else:
        def fbody(j, acc2):
            start = pl.multiple_of(j * ff_chunk, ff_chunk)
            return ffn_step(w1_ref[:, pl.ds(start, ff_chunk)],
                            b1_ref[:, pl.ds(start, ff_chunk)],
                            w2_ref[pl.ds(start, ff_chunk), :], acc2)
        acc2 = jax.lax.fori_loop(0, nf, fbody, acc2_0)

    # ---- residual + LayerNorm 2 ----
    z = y + acc2 + b2_ref[...]
    mu2 = jnp.mean(z, axis=-1, keepdims=True)
    var2 = jnp.mean(jnp.square(z - mu2), axis=-1, keepdims=True)
    z = (z - mu2) * jax.lax.rsqrt(var2 + eps) * g2_ref[...] + be2_ref[...]

    o_ref[0] = z.astype(o_ref.dtype)


# --------------------------------------------------------------------------------------
# Wrapper
# --------------------------------------------------------------------------------------
def _spec(shape, index_map, single_buffer):
    if single_buffer:
        return pl.BlockSpec(shape, index_map, pipeline_mode=pl.Buffered(1))
    return pl.BlockSpec(shape, index_map)


def _encoder_layer_impl(x, params, *, num_heads, eps, q_block, kv_block, ff_block,
                        single_buffer):
    B, T, D = x.shape
    assert D % num_heads == 0, "embed_dim must be divisible by num_heads"
    head_dim = D // num_heads
    FF = params["w1"].shape[1]
    assert FF > 0  # TODO(synk): identity-FFN path for dim_feedforward == 0

    tq = q_block or _pick(T, (256, 128))        # cap at 128-256 (MXU M dim; low vreg pressure)
    tk = kv_block or _pick(T, (512, 256, 128))  # K/V is VMEM-resident -> larger chunks are fine
    tkv = _pick(T, (512, 256, 128))             # K/V projection chunk over T
    ffc = ff_block or _pick(FF, (512, 256, 128))
    assert T % tq == 0 and T % tk == 0 and T % tkv == 0 and FF % ffc == 0

    bf16 = jnp.bfloat16
    scale = 1.0 / math.sqrt(head_dim)
    vmem_limit = _vmem_limit_bytes()
    H, hd = num_heads, head_dim

    # Big matrices in bf16 (MXU native, half the DMA/VMEM); bias / LN params stay f32.
    wkv_bf = params["wkv"].astype(bf16)
    bkv = params["bkv"]
    wq_bf = (params["wq"] * scale).astype(bf16)   # attention scale folded into the Q projection
    bq_s = params["bq"] * scale

    # ---- Kernel A: chunked K/V projection (once per batch element, grid over T chunks) ----
    k, v = pl.pallas_call(
        functools.partial(kv_proj_kernel, num_heads=H, head_dim=hd),
        out_shape=(jax.ShapeDtypeStruct((B, H, hd, T), bf16),
                   jax.ShapeDtypeStruct((B, H, T, hd), bf16)),
        grid_spec=pltpu.PrefetchScalarGridSpec(
            num_scalar_prefetch=0,
            grid=(B, T // tkv),
            in_specs=[
                pl.BlockSpec((1, tkv, D), lambda b, t: (b, t, 0)),
                _spec(wkv_bf.shape, lambda b, t: (0, 0), single_buffer),
                _spec(bkv.shape, lambda b, t: (0, 0), single_buffer),
            ],
            out_specs=[
                pl.BlockSpec((1, H, hd, tkv), lambda b, t: (b, 0, 0, t)),
                pl.BlockSpec((1, H, tkv, hd), lambda b, t: (b, 0, t, 0)),
            ],
        ),
        compiler_params=pltpu.CompilerParams(
            dimension_semantics=("parallel", "parallel"),
            vmem_limit_bytes=vmem_limit,
        ),
        cost_estimate=pl.CostEstimate(
            flops=int(4 * B * T * D * D),
            transcendentals=0,
            bytes_accessed=int(B * T * D * 2 + D * 2 * D * 2 + 4 * B * T * D * 2),
        ),
    )(x.astype(bf16), wkv_bf, bkv)   # x for K/V in bf16 at the boundary (kernel downcasts anyway)

    # ---- Kernel B: attention + FFN + LayerNorms, grid = (B, T // tq), fully parallel ----
    ordered = [
        wq_bf, bq_s,
        params["wo"].astype(bf16), params["bo"],
        params["g1"], params["be1"],
        params["w1"].astype(bf16), params["b1"],
        params["w2"].astype(bf16), params["b2"],
        params["g2"], params["be2"],
    ]

    def resident_spec(p):
        nd = p.ndim
        return _spec(p.shape, lambda b, qi, _nd=nd: (0,) * _nd, single_buffer)

    in_specs = [
        pl.BlockSpec((1, tq, D), lambda b, qi: (b, qi, 0)),                      # query block (f32)
        _spec((1, H, hd, T), lambda b, qi: (b, 0, 0, 0), single_buffer),         # K (bf16)
        _spec((1, H, T, hd), lambda b, qi: (b, 0, 0, 0), single_buffer),         # V (bf16)
    ] + [resident_spec(p) for p in ordered]
    out_specs = pl.BlockSpec((1, tq, D), lambda b, qi: (b, qi, 0))

    kernel = functools.partial(
        encoder_block_kernel,
        num_heads=H, head_dim=hd, kv_chunk=tk, ff_chunk=ffc, eps=eps,
    )

    flops = int(2 * B * T * (2 * D * D + 2 * T * D + 2 * D * FF))
    bytes_acc = int(B * T * D * 4 * 2 + 2 * B * T * D * 2
                    + (2 * D * D + 2 * D * FF) * 2 + 6 * D * 4)

    out = pl.pallas_call(
        kernel,
        out_shape=jax.ShapeDtypeStruct((B, T, D), x.dtype),
        grid_spec=pltpu.PrefetchScalarGridSpec(
            num_scalar_prefetch=0,
            grid=(B, T // tq),
            in_specs=in_specs,
            out_specs=out_specs,
        ),
        compiler_params=pltpu.CompilerParams(
            dimension_semantics=("parallel", "parallel"),
            vmem_limit_bytes=vmem_limit,
        ),
        cost_estimate=pl.CostEstimate(
            flops=flops,
            transcendentals=int(B * H * T * T),
            bytes_accessed=bytes_acc,
        ),
    )(x, k, v, *ordered)
    return out


def transformer_encoder_layer(x, params, *, num_heads, eps=1e-5,
                              q_block=None, kv_block=None, ff_block=None):
    """x: (B, T, D) float32. params: dict of f32 weights pre-transposed so y = x @ W + b."""
    kwargs = dict(num_heads=num_heads, eps=eps, q_block=q_block,
                  kv_block=kv_block, ff_block=ff_block)
    try:
        out = _encoder_layer_impl(x, params, single_buffer=True, **kwargs)
        return jax.block_until_ready(out)
    except Exception:
        # TODO(synk): remove fallback once pl.Buffered(1) is confirmed on the target jax/libtpu.
        out = _encoder_layer_impl(x, params, single_buffer=False, **kwargs)
        return jax.block_until_ready(out)


# --------------------------------------------------------------------------------------
# Parameters + pure-JAX reference
# --------------------------------------------------------------------------------------
def make_params(key, d_model, num_heads, feedforward_factor):
    D = d_model
    FF = feedforward_factor * d_model
    ks = jax.random.split(key, 12)

    def xavier(k, shape):           # PyTorch convention: weight is (out, in)
        fan_out, fan_in = shape
        a = math.sqrt(6.0 / (fan_in + fan_out))
        return jax.random.uniform(k, shape, jnp.float32, -a, a)

    in_proj_w = xavier(ks[0], (3 * D, D))
    wq = in_proj_w[:D].T                    # (D, D), pre-transposed: y = x @ W
    wkv = in_proj_w[D:].T                   # (D, 2D) fused K/V projection
    wo = xavier(ks[1], (D, D)).T
    w1 = xavier(ks[2], (FF, D)).T           # (D, FF)
    w2 = xavier(ks[3], (D, FF)).T           # (FF, D)

    nrm = lambda k, shape, s: s * jax.random.normal(k, shape, jnp.float32)
    params = {
        "wq": wq, "bq": nrm(ks[4], (1, D), 0.02),
        "wkv": wkv, "bkv": nrm(ks[5], (1, 2 * D), 0.02),
        "wo": wo, "bo": nrm(ks[6], (1, D), 0.02),
        "g1": 1.0 + nrm(ks[7], (1, D), 0.05), "be1": nrm(ks[8], (1, D), 0.02),
        "w1": w1, "b1": nrm(ks[9], (1, FF), 0.02),
        "w2": w2, "b2": nrm(ks[10], (1, D), 0.02),
        "g2": 1.0 + nrm(ks[11], (1, D), 0.05), "be2": jnp.zeros((1, D), jnp.float32),
    }
    return params


def reference_forward(x, params, *, num_heads, eps=1e-5):
    """Pure-JAX (f32) reference mirroring the PyTorch forward in eval mode."""
    B, T, D = x.shape
    hd = D // num_heads
    q = x @ params["wq"] + params["bq"]
    kv = x @ params["wkv"] + params["bkv"]
    k, v = kv[..., :D], kv[..., D:]
    q = q.reshape(B, T, num_heads, hd)
    k = k.reshape(B, T, num_heads, hd)
    v = v.reshape(B, T, num_heads, hd)
    att = jnp.einsum("bthd,bThd->bhtT", q, k) / math.sqrt(hd)
    att = jax.nn.softmax(att, axis=-1)
    out = jnp.einsum("bhtT,bThd->bthd", att, v).reshape(B, T, D)
    out = out @ params["wo"] + params["bo"]

    def ln(y, g, b):
        mu = jnp.mean(y, axis=-1, keepdims=True)
        var = jnp.mean((y - mu) ** 2, axis=-1, keepdims=True)
        return (y - mu) / jnp.sqrt(var + eps) * g + b

    y = ln(x + out, params["g1"], params["be1"])
    h = jnp.maximum(y @ params["w1"] + params["b1"], 0.0)
    h = h @ params["w2"] + params["b2"]
    return ln(y + h, params["g2"], params["be2"])


if __name__ == "__main__":
    B, T, d_model, n_head, ff_factor = 2, 8, 32, 4, 4

    key = jax.random.PRNGKey(0)
    kx, kp = jax.random.split(key)
    x = jax.random.normal(kx, (B, T, d_model), jnp.float32)
    params = make_params(kp, d_model, n_head, ff_factor)

    out = transformer_encoder_layer(x, params, num_heads=n_head)
    out = jax.block_until_ready(out)

    ref = reference_forward(x, params, num_heads=n_head)
    # Tolerance loosened vs. a pure-f32 kernel: matmuls run bf16-in / f32-accumulate on the MXU,
    # K/V/x are bf16 at the boundary, and the softmax denominator uses the approximate EUP
    # reciprocal (~1e-2-level relative error per attention row).
    np.testing.assert_allclose(np.asarray(out), np.asarray(ref), rtol=5e-2, atol=5e-2)

    print("KERNEL_OK")
</pallas_src>

<mosaic_0001>
module attributes {stable_mosaic.version = 11 : i64} {
  func.func @kv_proj_kernel(%arg0: i32, %arg1: i32, %arg2: memref<1x8x32xbf16, #tpu.memory_space<vmem>>, %arg3: memref<32x64xbf16, #tpu.memory_space<vmem>>, %arg4: memref<1x64xf32, #tpu.memory_space<vmem>>, %arg5: memref<1x4x8x8xbf16, #tpu.memory_space<vmem>>, %arg6: memref<1x4x8x8xbf16, #tpu.memory_space<vmem>>) attributes {dimension_semantics = [#tpu.dimension_semantics<parallel>, #tpu.dimension_semantics<parallel>], iteration_bounds = array<i64: 2, 1>, scalar_prefetch = 0 : i64, scratch_operands = 0 : i64, tpu.core_type = #tpu.core_type<tc>, window_params = [{transform_indices = @transform_0, window_bounds = array<i64: 1, 8, 32>}, {pipeline_mode = #tpu.pipeline_mode<synchronous>, transform_indices = @transform_1, window_bounds = array<i64: 32, 64>}, {pipeline_mode = #tpu.pipeline_mode<synchronous>, transform_indices = @transform_2, window_bounds = array<i64: 1, 64>}, {transform_indices = @transform_3, window_bounds = array<i64: 1, 4, 8, 8>}, {transform_indices = @transform_4, window_bounds = array<i64: 1, 4, 8, 8>}]} {
    %c0 = arith.constant 0 : index
    %c0_0 = arith.constant 0 : index
    %c0_1 = arith.constant 0 : index
    %0 = vector.load %arg2[%c0, %c0_0, %c0_1] : memref<1x8x32xbf16, #tpu.memory_space<vmem>>, vector<1x8x32xbf16>
    %1 = vector.shape_cast %0 : vector<1x8x32xbf16> to vector<8x32xbf16>
    %c0_2 = arith.constant 0 : index
    %c0_3 = arith.constant 0 : index
    %2 = vector.load %arg3[%c0_2, %c0_3] : memref<32x64xbf16, #tpu.memory_space<vmem>>, vector<32x64xbf16>
    %cst = arith.constant dense<0.000000e+00> : vector<8x64xf32>
    %3 = tpu.matmul %1, %2, %cst {dimension_numbers = #tpu.dot_dimension_numbers<[1], [0], [0], [1], [0, 0, 1, 1], [], []>} : vector<8x32xbf16>, vector<32x64xbf16>, vector<8x64xf32> -> vector<8x64xf32>
    %c0_4 = arith.constant 0 : index
    %c0_5 = arith.constant 0 : index
    %4 = vector.load %arg4[%c0_4, %c0_5] : memref<1x64xf32, #tpu.memory_space<vmem>>, vector<1x64xf32>
    %5 = vector.broadcast %4 : vector<1x64xf32> to vector<8x64xf32>
    %6 = arith.addf %3, %5 : vector<8x64xf32>
    %7 = vector.extract_strided_slice %6 {offsets = [0, 0], sizes = [8, 32], strides = [1, 1]} : vector<8x64xf32> to vector<8x32xf32>
    %8 = vector.shape_cast %7 : vector<8x32xf32> to vector<8x4x8xf32>
    %9 = vector.extract_strided_slice %6 {offsets = [0, 32], sizes = [8, 32], strides = [1, 1]} : vector<8x64xf32> to vector<8x32xf32>
    %10 = vector.shape_cast %9 : vector<8x32xf32> to vector<8x4x8xf32>
    %11 = tpu.transpose %8, [1, 2, 0] : vector<8x4x8xf32> -> vector<4x8x8xf32>
    %12 = arith.truncf %11 : vector<4x8x8xf32> to vector<4x8x8xbf16>
    %c0_6 = arith.constant 0 : index
    %c0_7 = arith.constant 0 : index
    %c0_8 = arith.constant 0 : index
    %c0_9 = arith.constant 0 : index
    %13 = vector.load %arg5[%c0_6, %c0_7, %c0_8, %c0_9] : memref<1x4x8x8xbf16, #tpu.memory_space<vmem>>, vector<1x4x8x8xbf16>
    %14 = vector.shape_cast %13 : vector<1x4x8x8xbf16> to vector<4x8x8xbf16>
    %15 = vector.shape_cast %12 : vector<4x8x8xbf16> to vector<1x4x8x8xbf16>
    tpu.vector_store %arg5[%c0_6, %c0_7, %c0_8, %c0_9], %15 {strides = array<i32>} : memref<1x4x8x8xbf16, #tpu.memory_space<vmem>>, vector<1x4x8x8xbf16>,
    %16 = tpu.transpose %10, [1, 0, 2] : vector<8x4x8xf32> -> vector<4x8x8xf32>
    %17 = arith.truncf %16 : vector<4x8x8xf32> to vector<4x8x8xbf16>
    %c0_10 = arith.constant 0 : index
    %c0_11 = arith.constant 0 : index
    %c0_12 = arith.constant 0 : index
    %c0_13 = arith.constant 0 : index
    %18 = vector.load %arg6[%c0_10, %c0_11, %c0_12, %c0_13] : memref<1x4x8x8xbf16, #tpu.memory_space<vmem>>, vector<1x4x8x8xbf16>
    %19 = vector.shape_cast %18 : vector<1x4x8x8xbf16> to vector<4x8x8xbf16>
    %20 = vector.shape_cast %17 : vector<4x8x8xbf16> to vector<1x4x8x8xbf16>
    tpu.vector_store %arg6[%c0_10, %c0_11, %c0_12, %c0_13], %20 {strides = array<i32>} : memref<1x4x8x8xbf16, #tpu.memory_space<vmem>>, vector<1x4x8x8xbf16>,
    return
  }
  func.func @transform_0(%arg0: i32, %arg1: i32) -> (i32, i32, i32) {
    %c0_i32 = arith.constant 0 : i32
    %c0_i32_0 = arith.constant 0 : i32
    return %arg0, %arg1, %c0_i32 : i32, i32, i32
  }
  func.func @transform_1(%arg0: i32, %arg1: i32) -> (i32, i32) {
    %c0_i32 = arith.constant 0 : i32
    %c0_i32_0 = arith.constant 0 : i32
    %c0_i32_1 = arith.constant 0 : i32
    return %c0_i32, %c0_i32_0 : i32, i32
  }
  func.func @transform_2(%arg0: i32, %arg1: i32) -> (i32, i32) {
    %c0_i32 = arith.constant 0 : i32
    %c0_i32_0 = arith.constant 0 : i32
    %c0_i32_1 = arith.constant 0 : i32
    return %c0_i32, %c0_i32_0 : i32, i32
  }
  func.func @transform_3(%arg0: i32, %arg1: i32) -> (i32, i32, i32, i32) {
    %c0_i32 = arith.constant 0 : i32
    %c0_i32_0 = arith.constant 0 : i32
    %c0_i32_1 = arith.constant 0 : i32
    return %arg0, %c0_i32, %c0_i32_0, %arg1 : i32, i32, i32, i32
  }
  func.func @transform_4(%arg0: i32, %arg1: i32) -> (i32, i32, i32, i32) {
    %c0_i32 = arith.constant 0 : i32
    %c0_i32_0 = arith.constant 0 : i32
    %c0_i32_1 = arith.constant 0 : i32
    return %arg0, %c0_i32, %arg1, %c0_i32_0 : i32, i32, i32, i32
  }
}

module attributes {stable_mosaic.version = 11 : i64} {
  func.func @kv_proj_kernel(%arg0: i32, %arg1: i32, %arg2: memref<1x8x32xbf16, #tpu.memory_space<vmem>>, %arg3: memref<32x64xbf16, #tpu.memory_space<vmem>>, %arg4: memref<1x64xf32, #tpu.memory_space<vmem>>, %arg5: memref<1x4x8x8xbf16, #tpu.memory_space<vmem>>, %arg6: memref<1x4x8x8xbf16, #tpu.memory_space<vmem>>) attributes {dimension_semantics = [#tpu.dimension_semantics<parallel>, #tpu.dimension_semantics<parallel>], iteration_bounds = array<i64: 2, 1>, scalar_prefetch = 0 : i64, scratch_operands = 0 : i64, tpu.core_type = #tpu.core_type<tc>, window_params = [{transform_indices = @transform_0, window_bounds = array<i64: 1, 8, 32>}, {pipeline_mode = #tpu.pipeline_mode<synchronous>, transform_indices = @transform_1, window_bounds = array<i64: 32, 64>}, {pipeline_mode = #tpu.pipeline_mode<synchronous>, transform_indices = @transform_2, window_bounds = array<i64: 1, 64>}, {transform_indices = @transform_3, window_bounds = array<i64: 1, 4, 8, 8>}, {transform_indices = @transform_4, window_bounds = array<i64: 1, 4, 8, 8>}]} {
    %c0 = arith.constant 0 : index
    %c0_0 = arith.constant 0 : index
    %c0_1 = arith.constant 0 : index
    %0 = vector.load %arg2[%c0, %c0_0, %c0_1] : memref<1x8x32xbf16, #tpu.memory_space<vmem>>, vector<1x8x32xbf16>
    %1 = vector.shape_cast %0 : vector<1x8x32xbf16> to vector<8x32xbf16>
    %c0_2 = arith.constant 0 : index
    %c0_3 = arith.constant 0 : index
    %2 = vector.load %arg3[%c0_2, %c0_3] : memref<32x64xbf16, #tpu.memory_space<vmem>>, vector<32x64xbf16>
    %cst = arith.constant dense<0.000000e+00> : vector<8x64xf32>
    %3 = tpu.matmul %1, %2, %cst {dimension_numbers = #tpu.dot_dimension_numbers<[1], [0], [0], [1], [0, 0, 1, 1], [], []>} : vector<8x32xbf16>, vector<32x64xbf16>, vector<8x64xf32> -> vector<8x64xf32>
    %c0_4 = arith.constant 0 : index
    %c0_5 = arith.constant 0 : index
    %4 = vector.load %arg4[%c0_4, %c0_5] : memref<1x64xf32, #tpu.memory_space<vmem>>, vector<1x64xf32>
    %5 = vector.broadcast %4 : vector<1x64xf32> to vector<8x64xf32>
    %6 = arith.addf %3, %5 : vector<8x64xf32>
    %7 = vector.extract_strided_slice %6 {offsets = [0, 0], sizes = [8, 32], strides = [1, 1]} : vector<8x64xf32> to vector<8x32xf32>
    %8 = vector.shape_cast %7 : vector<8x32xf32> to vector<8x4x8xf32>
    %9 = vector.extract_strided_slice %6 {offsets = [0, 32], sizes = [8, 32], strides = [1, 1]} : vector<8x64xf32> to vector<8x32xf32>
    %10 = vector.shape_cast %9 : vector<8x32xf32> to vector<8x4x8xf32>
    %11 = tpu.transpose %8, [1, 2, 0] : vector<8x4x8xf32> -> vector<4x8x8xf32>
    %12 = arith.truncf %11 : vector<4x8x8xf32> to vector<4x8x8xbf16>
    %c0_6 = arith.constant 0 : index
    %c0_7 = arith.constant 0 : index
    %c0_8 = arith.constant 0 : index
    %c0_9 = arith.constant 0 : index
    %13 = vector.load %arg5[%c0_6, %c0_7, %c0_8, %c0_9] : memref<1x4x8x8xbf16, #tpu.memory_space<vmem>>, vector<1x4x8x8xbf16>
    %14 = vector.shape_cast %13 : vector<1x4x8x8xbf16> to vector<4x8x8xbf16>
    %15 = vector.shape_cast %12 : vector<4x8x8xbf16> to vector<1x4x8x8xbf16>
    tpu.vector_store %arg5[%c0_6, %c0_7, %c0_8, %c0_9], %15 {strides = array<i32>} : memref<1x4x8x8xbf16, #tpu.memory_space<vmem>>, vector<1x4x8x8xbf16>,
    %16 = tpu.transpose %10, [1, 0, 2] : vector<8x4x8xf32> -> vector<4x8x8xf32>
    %17 = arith.truncf %16 : vector<4x8x8xf32> to vector<4x8x8xbf16>
    %c0_10 = arith.constant 0 : index
    %c0_11 = arith.constant 0 : index
    %c0_12 = arith.constant 0 : index
    %c0_13 = arith.constant 0 : index
    %18 = vector.load %arg6[%c0_10, %c0_11, %c0_12, %c0_13] : memref<1x4x8x8xbf16, #tpu.memory_space<vmem>>, vector<1x4x8x8xbf16>
    %19 = vector.shape_cast %18 : vector<1x4x8x8xbf16> to vector<4x8x8xbf16>
    %20 = vector.shape_cast %17 : vector<4x8x8xbf16> to vector<1x4x8x8xbf16>
    tpu.vector_store %arg6[%c0_10, %c0_11, %c0_12, %c0_13], %20 {strides = array<i32>} : memref<1x4x8x8xbf16, #tpu.memory_space<vmem>>, vector<1x4x8x8xbf16>,
    return
  }
  func.func @transform_0(%arg0: i32, %arg1: i32) -> (i32, i32, i32) {
    %c0_i32 = arith.constant 0 : i32
    %c0_i32_0 = arith.constant 0 : i32
    return %arg0, %arg1, %c0_i32 : i32, i32, i32
  }
  func.func @transform_1(%arg0: i32, %arg1: i32) -> (i32, i32) {
    %c0_i32 = arith.constant 0 : i32
    %c0_i32_0 = arith.constant 0 : i32
    %c0_i32_1 = arith.constant 0 : i32
    return %c0_i32, %c0_i32_0 : i32, i32
  }
  func.func @transform_2(%arg0: i32, %arg1: i32) -> (i32, i32) {
    %c0_i32 = arith.constant 0 : i32
    %c0_i32_0 = arith.constant 0 : i32
    %c0_i32_1 = arith.constant 0 : i32
    return %c0_i32, %c0_i32_0 : i32, i32
  }
  func.func @transform_3(%arg0: i32, %arg1: i32) -> (i32, i32, i32, i32) {
    %c0_i32 = arith.constant 0 : i32
    %c0_i32_0 = arith.constant 0 : i32
    %c0_i32_1 = arith.constant 0 : i32
    return %arg0, %c0_i32, %c0_i32_0, %arg1 : i32, i32, i32, i32
  }
  func.func @transform_4(%arg0: i32, %arg1: i32) -> (i32, i32, i32, i32) {
    %c0_i32 = arith.constant 0 : i32
    %c0_i32_0 = arith.constant 0 : i32
    %c0_i32_1 = arith.constant 0 : i32
    return %arg0, %c0_i32, %arg1, %c0_i32_0 : i32, i32, i32, i32
  }
}

</mosaic_0001>

<llo_original>
// kernel: tpu_custom_call.1
$region0: #{tpu_custom_call.1}
  #allocation0 [shape = 'u32[]', space=smem, size = 0x4, offset = 0x4, fixed_abs, tag = 'smem constant byte address 0x4 - core index']
  #allocation1 [shape = 'u32[144,128]{1,0:T(1,128)}', space=vmem, size = 0x12000, scoped, tag = 'internal scratch']
  %s0 = inlined_call_operand.hbm [shape: bf16[2,8,32], index: 0, kind: input, shape index: {}]
  %s1 = inlined_call_operand.hbm [shape: bf16[32,64], index: 1, kind: input, shape index: {}]
  %s2 = inlined_call_operand.vmem [shape: f32[1,64], index: 2, kind: input, shape index: {}]
  %s3 = inlined_call_operand.hbm [shape: bf16[2,4,8,8], index: 3, kind: output, shape index: {0}]
  %s4 = inlined_call_operand.hbm [shape: bf16[2,4,8,8], index: 4, kind: output, shape index: {1}]
  %5 = xla_tuple %s3, %s4
  %s6 = sld [smem:[#allocation0]]
  $region61: #{tpu_custom_call.1} parent=0
    _
  %s8 = ssub.s32 1, %s6
  %s9 = scalar_select 0, %s8, %s6
  $region1: #{tpu_custom_call.1} parent=0
    #allocation2 [shape = 'u8[4096]{0}', space=vmem, size = 0x1000, scoped, tag = 'input window, operand 0']
    #allocation3 [shape = 's32[2]{0}', space=sflag, size = 0x8, scoped, tag = 'scoped memory for tpu_custom_call.1']
    #allocation4 [shape = 's32[2]{0}', space=sflag, size = 0x8, scoped, tag = 'scoped memory for tpu_custom_call.1']
    #allocation5 [shape = 'u8[8192]{0}', space=vmem, size = 0x2000, scoped, tag = 'input window, operand 1, single buffered']
    #allocation6 [shape = 's32[1]{0}', space=sflag, size = 0x4, scoped, tag = 'scoped memory for tpu_custom_call.1']
    #allocation7 [shape = 'u8[16384]{0}', space=vmem, size = 0x4000, scoped, tag = 'output window, operand 0']
    #allocation8 [shape = 'u8[16384]{0}', space=vmem, size = 0x4000, scoped, tag = 'output window, operand 1']
    #allocation9 [shape = 's32[2]{0}', space=sflag, size = 0x8, scoped, tag = 'scoped memory for tpu_custom_call.1']
    %10 = vsyncpa [#allocation3], 0
    %s11 = scalar_lea.sflag [#allocation3], 1
    %12 = vsyncpa %s11, 0
    %13 = vsyncpa [#allocation6], 0
    %14 = vsyncpa [#allocation4], 0
    %s15 = scalar_lea.sflag [#allocation4], 1
    %16 = vsyncpa %s15, 0
    %17 = vsyncpa [#allocation9], 0
    %s18 = scalar_lea.sflag [#allocation9], 1
    %19 = vsyncpa %s18, 0
    loop: start=0, step=1, limit=4
    $region2: #{tpu_custom_call.1} parent=1 // loop_pre_header
      _
    $region3: #{tpu_custom_call.1} parent=1 // loop_header
      %s21 = sphi 0, %s25
      %p22 = scmp.ge.s32.totalorder %s21, 4
      %s28 = sphi 0, %s40
      %s29 = sphi 0, %s36
      %s30 = sphi 0, %s28
      %s31 = sphi 0, %s29
      %s32 = sphi 0, %s30
      %s33 = sphi 0, %s31
      %s45 = sphi 0, %s47
      %s48 = sphi 0, %s45
      %s49 = sphi 0, %s48
      %s65 = sphi 0, %s49
      %s69 = sphi 0, %s69
      %s71 = sphi 0, %s69
      %s72 = sphi 0, %s71
      %s86 = sphi 0, %s72
      %s90 = sphi 0, %s90
      %s92 = sphi 0, %s90
      %s93 = sphi 0, %s92
      %s107 = sphi 0, %s93
      %s115 = sphi 0, %s117
      %s118 = sphi 0, %s115
      %s119 = sphi 0, %s118
      %s135 = sphi 0, %s119
      %s143 = sphi 0, %s145
      %s146 = sphi 0, %s143
      %s147 = sphi 0, %s146
      %s163 = sphi 0, %s147
    $region4: #{tpu_custom_call.1} parent=1 // loop_header_branch
      %24 = sbr.rel (%p22) target = $region8
    $region5: #{tpu_custom_call.1} parent=1 // loop_body
      %s26 = ssub.s32 %s21, 1
      %s27 = ssub.s32 %s21, 2
      %s34 = sadd.s32 1, %s29
      %p35 = scmp.ge.s32.totalorder %s34, 1
      %s36 = scalar_select %p35, 0, %s34
      %s37 = sadd.s32 1, %s28
      %s38 = scalar_select %p35, %s37, %s28
      %p39 = scmp.ge.s32.totalorder %s38, 2
      %s40 = scalar_select %p39, 0, %s38
      %s41 = ssub.s32 %s28, %s40
      %s42 = ssub.s32 %s29, %s36
      %s43 = sor.u32 %s41, %s42
      %p44 = scmp.eq.s32.totalorder %s43, 0
      %s46 = sadd.s32 %s45, 1
      %s47 = scalar_select %p44, %s45, %s46
      %p50 = pneg %p44
      %p51 = scmp.eq.s32.totalorder %s21, 1
      %p52 = por %p50, %p51
      %p53 = scmp.ne.s32.totalorder %s45, %s48
      %p54 = scmp.eq.s32.totalorder %s21, 0
      %p55 = por %p53, %p54
      %p56 = scmp.ne.s32.totalorder %s45, %s48
      %p57 = scmp.eq.s32.totalorder %s26, 1
      %p58 = por %p56, %p57
      %p59 = scmp.ne.s32.totalorder %s48, %s49
      %p60 = scmp.eq.s32.totalorder %s26, 0
      %p61 = por %p59, %p60
      %p62 = scmp.ne.s32.totalorder %s48, %s49
      %p63 = scmp.eq.s32.totalorder %s27, 1
      %p64 = por %p62, %p63
      %p66 = scmp.ne.s32.totalorder %s49, %s65
      %p67 = scmp.eq.s32.totalorder %s27, 0
      %p68 = por %p66, %p67
      %s70 = sadd.s32 %s69, 1
      %p73 = scmp.eq.s32.totalorder %s21, 1
      %p74 = scmp.ne.s32.totalorder %s69, %s71
      %p75 = scmp.eq.s32.totalorder %s21, 0
      %p76 = por %p74, %p75
      %p77 = scmp.ne.s32.totalorder %s69, %s71
      %p78 = scmp.eq.s32.totalorder %s26, 1
      %p79 = por %p77, %p78
      %p80 = scmp.ne.s32.totalorder %s71, %s72
      %p81 = scmp.eq.s32.totalorder %s26, 0
      %p82 = por %p80, %p81
      %p83 = scmp.ne.s32.totalorder %s71, %s72
      %p84 = scmp.eq.s32.totalorder %s27, 1
      %p85 = por %p83, %p84
      %p87 = scmp.ne.s32.totalorder %s72, %s86
      %p88 = scmp.eq.s32.totalorder %s27, 0
      %p89 = por %p87, %p88
      %s91 = sadd.s32 %s90, 1
      %p94 = scmp.eq.s32.totalorder %s21, 1
      %p95 = scmp.ne.s32.totalorder %s90, %s92
      %p96 = scmp.eq.s32.totalorder %s21, 0
      %p97 = por %p95, %p96
      %p98 = scmp.ne.s32.totalorder %s90, %s92
      %p99 = scmp.eq.s32.totalorder %s26, 1
      %p100 = por %p98, %p99
      %p101 = scmp.ne.s32.totalorder %s92, %s93
      %p102 = scmp.eq.s32.totalorder %s26, 0
      %p103 = por %p101, %p102
      %p104 = scmp.ne.s32.totalorder %s92, %s93
      %p105 = scmp.eq.s32.totalorder %s27, 1
      %p106 = por %p104, %p105
      %p108 = scmp.ne.s32.totalorder %s93, %s107
      %p109 = scmp.eq.s32.totalorder %s27, 0
      %p110 = por %p108, %p109
      %s111 = ssub.s32 %s28, %s40
      %s112 = ssub.s32 %s29, %s36
      %s113 = sor.u32 %s111, %s112
      %p114 = scmp.eq.s32.totalorder %s113, 0
      %s116 = sadd.s32 %s115, 1
      %s117 = scalar_select %p114, %s115, %s116
      %p120 = pneg %p114
      %p121 = scmp.eq.s32.totalorder %s21, 1
      %p122 = por %p120, %p121
      %p123 = scmp.ne.s32.totalorder %s115, %s118
      %p124 = scmp.eq.s32.totalorder %s21, 0
      %p125 = por %p123, %p124
      %p126 = scmp.ne.s32.totalorder %s115, %s118
      %p127 = scmp.eq.s32.totalorder %s26, 1
      %p128 = por %p126, %p127
      %p129 = scmp.ne.s32.totalorder %s118, %s119
      %p130 = scmp.eq.s32.totalorder %s26, 0
      %p131 = por %p129, %p130
      %p132 = scmp.ne.s32.totalorder %s118, %s119
      %p133 = scmp.eq.s32.totalorder %s27, 1
      %p134 = por %p132, %p133
      %p136 = scmp.ne.s32.totalorder %s119, %s135
      %p137 = scmp.eq.s32.totalorder %s27, 0
      %p138 = por %p136, %p137
      %s139 = ssub.s32 %s28, %s40
      %s140 = ssub.s32 %s29, %s36
      %s141 = sor.u32 %s139, %s140
      %p142 = scmp.eq.s32.totalorder %s141, 0
      %s144 = sadd.s32 %s143, 1
      %s145 = scalar_select %p142, %s143, %s144
      %p148 = pneg %p142
      %p149 = scmp.eq.s32.totalorder %s21, 1
      %p150 = por %p148, %p149
      %p151 = scmp.ne.s32.totalorder %s143, %s146
      %p152 = scmp.eq.s32.totalorder %s21, 0
      %p153 = por %p151, %p152
      %p154 = scmp.ne.s32.totalorder %s143, %s146
      %p155 = scmp.eq.s32.totalorder %s26, 1
      %p156 = por %p154, %p155
      %p157 = scmp.ne.s32.totalorder %s146, %s147
      %p158 = scmp.eq.s32.totalorder %s26, 0
      %p159 = por %p157, %p158
      %p160 = scmp.ne.s32.totalorder %s146, %s147
      %p161 = scmp.eq.s32.totalorder %s27, 1
      %p162 = por %p160, %p161
      %p164 = scmp.ne.s32.totalorder %s147, %s163
      %p165 = scmp.eq.s32.totalorder %s27, 0
      %p166 = por %p164, %p165
      %p167 = scmp.le.s32.totalorder 1, %s21
      %p168 = scmp.lt.s32.totalorder %s21, 3
      %p169 = pnand %p167, %p168
      %p170 = pneg %p169
      // Predicated region
      $region9: #{tpu_custom_call.1} parent=5 // pred_check
        _
      $region10: #{tpu_custom_call.1} parent=5 // pred_check_branch
        %172 = sbr.rel (%p169) target = $region12
      $region11: #{tpu_custom_call.1} parent=5 // pred_region
        %s173 = ssub.s32 %s21, 1
        // Predicated region
        $region13: #{tpu_custom_call.1} parent=11 // pred_check
          %p174 = pneg %p82
        $region14: #{tpu_custom_call.1} parent=11 // pred_check_branch
          %176 = sbr.rel (%p174) target = $region16
        $region15: #{tpu_custom_call.1} parent=11 // pred_region
          %s178 = ssub.s32 256, 256
          %179 = vsyncadd [#allocation6], %s178
          %s180 = sshll.u32 [#allocation5], 4
          %s181 = int_to_ptr.vmem [resolvable:$true] %s180
          %186 = dma.hbm_to_vmem [thread:$0]  %s1, 256, %s181, [#allocation6], 64, 64, 4
        $region16: #{tpu_custom_call.1} parent=11 // pred_fallthru
          _
        // Predicated region
        $region17: #{tpu_custom_call.1} parent=11 // pred_check
          %p187 = pneg %p103
        $region18: #{tpu_custom_call.1} parent=11 // pred_check_branch
          %189 = sbr.rel (%p187) target = $region20
        $region19: #{tpu_custom_call.1} parent=11 // pred_region
          _
        $region20: #{tpu_custom_call.1} parent=11 // pred_fallthru
          _
      $region12: #{tpu_custom_call.1} parent=5 // pred_fallthru
        _
      %p190 = scmp.lt.s32.totalorder %s21, 2
      // Predicated region
      $region21: #{tpu_custom_call.1} parent=5 // pred_check
        %p191 = pneg %p190
      $region22: #{tpu_custom_call.1} parent=5 // pred_check_branch
        %193 = sbr.rel (%p191) target = $region24
      $region23: #{tpu_custom_call.1} parent=5 // pred_region
        // Predicated region
        $region25: #{tpu_custom_call.1} parent=23 // pred_check
          %p194 = pneg %p55
        $region26: #{tpu_custom_call.1} parent=23 // pred_check_branch
          %196 = sbr.rel (%p194) target = $region28
        $region27: #{tpu_custom_call.1} parent=23 // pred_region
          %s197 = sand.u32 %s45, 1
          %s198 = scalar_lea.sflag [#allocation3], %s197
          %s199 = sand.u32 %s45, 1
          %s200 = smul.addr %s199, 4
          %s201 = scalar_lea.vmem [#allocation2], %s200
          %s203 = ssub.s32 64, 64
          %204 = vsyncadd %s198, %s203
          %s205 = sadd.s32 %s29, %s28
          %s206 = smul.addr %s205, 64
          %s207 = scalar_lea.hbm %s0, %s206
          %s209 = sshll.u32 %s201, 4
          %s210 = int_to_ptr.vmem [resolvable:$true] %s209
          %212 = dma.hbm_to_vmem [thread:$0]  %s207, 64, %s210, %s198
        $region28: #{tpu_custom_call.1} parent=23 // pred_fallthru
          _
      $region24: #{tpu_custom_call.1} parent=5 // pred_fallthru
        _
      %p213 = scmp.le.s32.totalorder 1, %s21
      %p214 = scmp.lt.s32.totalorder %s21, 3
      %p215 = pnand %p213, %p214
      %p216 = pneg %p215
      // Predicated region
      $region29: #{tpu_custom_call.1} parent=5 // pred_check
        _
      $region30: #{tpu_custom_call.1} parent=5 // pred_check_branch
        %218 = sbr.rel (%p215) target = $region32
      $region31: #{tpu_custom_call.1} parent=5 // pred_region
        %s219 = ssub.s32 %s21, 1
        %s220 = sand.u32 %s48, 1
        %s221 = scalar_lea.sflag [#allocation3], %s220
        %s222 = sand.u32 %s48, 1
        %s223 = smul.addr %s222, 4
        %s224 = scalar_lea.vmem [#allocation2], %s223
        // Predicated region
        $region33: #{tpu_custom_call.1} parent=31 // pred_check
          %p225 = pneg %p61
        $region34: #{tpu_custom_call.1} parent=31 // pred_check_branch
          %227 = sbr.rel (%p225) target = $region36
        $region35: #{tpu_custom_call.1} parent=31 // pred_region
          %228 = dma.done %s221, 64
        $region36: #{tpu_custom_call.1} parent=31 // pred_fallthru
          _
        // Predicated region
        $region37: #{tpu_custom_call.1} parent=31 // pred_check
          %p229 = pneg %p82
        $region38: #{tpu_custom_call.1} parent=31 // pred_check_branch
          %231 = sbr.rel (%p229) target = $region40
        $region39: #{tpu_custom_call.1} parent=31 // pred_region
          %232 = dma.done [#allocation6], 256
        $region40: #{tpu_custom_call.1} parent=31 // pred_fallthru
          _
        %s233 = sand.u32 %s48, 1
        %s234 = scalar_lea.sflag [#allocation3], %s233
        %s235 = sand.u32 %s48, 1
        %s236 = smul.addr %s235, 4
        %s237 = scalar_lea.vmem [#allocation2], %s236
        %p238 = pneg %p61
        %p239 = pneg %p58
        %p240 = pneg %p82
        %p241 = pneg %p79
        %p242 = pneg %p103
        %p243 = pneg %p100
        %p244 = pneg %p131
        %p245 = pneg %p128
        %s246 = sand.u32 %s118, 1
        %s247 = scalar_lea.sflag [#allocation4], %s246
        %s248 = sand.u32 %s118, 1
        %s249 = smul.addr %s248, 16
        %s250 = scalar_lea.vmem [#allocation7], %s249
        %p251 = pneg %p159
        %p252 = pneg %p156
        %s253 = sand.u32 %s146, 1
        %s254 = scalar_lea.sflag [#allocation9], %s253
        %s255 = sand.u32 %s146, 1
        %s256 = smul.addr %s255, 16
        %s257 = scalar_lea.vmem [#allocation8], %s256
        %v259 = vld [vmem:[%s224] sm:$0xf]
        %v260 = vld [vmem:[#allocation5] sm:$0xf]
        %v261 = vld [vmem:[#allocation5 + $0x4] sm:$0xf]
        %v262 = vld [vmem:[#allocation5 + $0x8] sm:$0xf]
        %v263 = vld [vmem:[#allocation5 + $0xc] sm:$0xf]
        %v264 = vld [vmem:[%s2] sm:$0x1]
        %v266 = vlaneseq
        %v267 = vshrl.u32 %v266, 7
        %v268 = vsub.s32 0, %v267
        %v269 = vrot.slane %v264, %v268
        %v275 = vunpack.c.l.b16 %v260
        %v276 = vunpack.c.l.b16 %v261
        %v277 = vunpack.c.l.b16 %v262
        %v278 = vunpack.c.l.b16 %v263
        %v279 = vpack.c.b16 %v276, %v275
        %v280 = vpack.c.b16 %v278, %v277
        %vm283 = vcmask 261120
        %v285 = vsel %vm283, %v259, 0
        %287 = vmatprep.subr.bf16.mxu0 0
        %288 = vmatpush1.bf16.msra.mxu0 %v279
        %289 = vmatprep.subr.bf16.mxu0 0
        %290 = vmatpush1.bf16.msra.mxu0 %v280
        %291 = vmatprep.subr.bf16.mxu0 0
        %292 = vmatpush1.bf16.msra.mxu0 0
        %293 = vmatprep.subr.bf16.mxu0 0
        %294 = vmatpush1.bf16.msra.mxu0 0
        %295 = vmatprep.subr.bf16.mxu0 0
        %296 = vmatpush1.bf16.msra.mxu0 0
        %297 = vmatprep.subr.bf16.mxu0 0
        %298 = vmatpush1.bf16.msra.mxu0 0
        %299 = vmatprep.subr.bf16.mxu0 0
        %300 = vmatpush1.bf16.msra.mxu0 0
        %301 = vmatprep.subr.bf16.mxu0 0
        %302 = vmatpush1.bf16.msra.mxu0 0
        %303 = vmatprep.subr.bf16.mxu0 0
        %304 = vmatpush1.bf16.msra.mxu0 0
        %305 = vmatprep.subr.bf16.mxu0 0
        %306 = vmatpush1.bf16.msra.mxu0 0
        %307 = vmatprep.subr.bf16.mxu0 0
        %308 = vmatpush1.bf16.msra.mxu0 0
        %309 = vmatprep.subr.bf16.mxu0 0
        %310 = vmatpush1.bf16.msra.mxu0 0
        %311 = vmatprep.subr.bf16.mxu0 0
        %312 = vmatpush1.bf16.msra.mxu0 0
        %313 = vmatprep.subr.bf16.mxu0 0
        %314 = vmatpush1.bf16.msra.mxu0 0
        %315 = vmatprep.subr.bf16.mxu0 0
        %316 = vmatpush1.bf16.msra.mxu0 0
        %317 = vmatprep.subr.bf16.mxu0 0
        %318 = vmatpush1.bf16.msra.mxu0 0
        %319 = vmatprep.mubr.bf16.mxu0 0
        %320 = vmatmul.mubr.bf16.gmra.mrb[0].mxu0 %v285
        %v321 = vpop.f32.mrb[0].mxu0
        %v322 = vadd.f32 %v269, %v321
        %v323 = vpop.f32.mrb[0].mxu0
        %v324 = vpop.f32.mrb[0].mxu0
        %v325 = vpop.f32.mrb[0].mxu0
        %326 = vdwg.mxu0
        %328 = vrot.lane.b32.xlu0 %v322, 120
        %v329 = vpop.permute.xlu0 %328
        %331 = vrot.lane.b32.xlu0 %v322, 112
        %v332 = vpop.permute.xlu0 %331
        %334 = vrot.lane.b32.xlu0 %v322, 104
        %v335 = vpop.permute.xlu0 %334
        %v337 = vcombine.low %v322, %v332
        %v338 = vcombine.high %v322, %v332
        %v340 = vunpack.c.l.s4 1983009808
        %v341 = vunpack.c.0.s8 %v340
        %v342 = vlaneseq
        %v343 = vshrl.u32 %v342, 7
        %v344 = vsub.s32 %v341, %v343
        %v345 = vrot.slane %v337, %v344
        %v347 = vunpack.c.l.s4 1983009808
        %v348 = vunpack.c.0.s8 %v347
        %v349 = vlaneseq
        %v350 = vshrl.u32 %v349, 7
        %v351 = vsub.s32 %v348, %v350
        %v352 = vrot.slane %v338, %v351
        %v353 = vcombine.low %v329, %v335
        %v354 = vcombine.high %v329, %v335
        %v356 = vunpack.c.l.s4 1983009808
        %v357 = vunpack.c.0.s8 %v356
        %v358 = vlaneseq
        %v359 = vshrl.u32 %v358, 7
        %v360 = vsub.s32 %v357, %v359
        %v361 = vrot.slane %v353, %v360
        %v363 = vunpack.c.l.s4 1983009808
        %v364 = vunpack.c.0.s8 %v363
        %v365 = vlaneseq
        %v366 = vshrl.u32 %v365, 7
        %v367 = vsub.s32 %v364, %v366
        %v368 = vrot.slane %v354, %v367
        %v369 = vcombine.low %v345, %v361
        %v370 = vcombine.high %v345, %v361
        %v372 = vunpack.c.l.s4 1934713408
        %v373 = vunpack.c.0.s8 %v372
        %v374 = vlaneseq
        %v375 = vshrl.u32 %v374, 7
        %v376 = vsub.s32 %v373, %v375
        %v377 = vrot.slane %v369, %v376
        %v379 = vunpack.c.l.s4 1934713408
        %v380 = vunpack.c.0.s8 %v379
        %v381 = vlaneseq
        %v382 = vshrl.u32 %v381, 7
        %v383 = vsub.s32 %v380, %v382
        %v384 = vrot.slane %v370, %v383
        %v385 = vcombine.low %v352, %v368
        %v386 = vcombine.high %v352, %v368
        %v388 = vunpack.c.l.s4 1934713408
        %v389 = vunpack.c.0.s8 %v388
        %v390 = vlaneseq
        %v391 = vshrl.u32 %v390, 7
        %v392 = vsub.s32 %v389, %v391
        %v393 = vrot.slane %v385, %v392
        %v395 = vunpack.c.l.s4 1934713408
        %v396 = vunpack.c.0.s8 %v395
        %v397 = vlaneseq
        %v398 = vshrl.u32 %v397, 7
        %v399 = vsub.s32 %v396, %v398
        %v400 = vrot.slane %v386, %v399
        %v401 = vcombine.high %v377, 0.0
        %v402 = vcombine.high %v384, 0.0
        %v403 = vcombine.high %v393, 0.0
        %v404 = vcombine.high %v400, 0.0
        %405 = vrot.lane.b32.xlu0 %v322, 96
        %v406 = vpop.permute.xlu0 %405
        %407 = vrot.lane.b32.xlu0 %v329, 96
        %v408 = vpop.permute.xlu0 %407
        %409 = vrot.lane.b32.xlu0 %v332, 96
        %v410 = vpop.permute.xlu0 %409
        %411 = vrot.lane.b32.xlu0 %v335, 96
        %v412 = vpop.permute.xlu0 %411
        %v417 = vcombine.low %v406, %v410
        %v418 = vcombine.high %v406, %v410
        %v420 = vunpack.c.l.s4 1983009808
        %v421 = vunpack.c.0.s8 %v420
        %v422 = vlaneseq
        %v423 = vshrl.u32 %v422, 7
        %v424 = vsub.s32 %v421, %v423
        %v425 = vrot.slane %v417, %v424
        %v427 = vunpack.c.l.s4 1983009808
        %v428 = vunpack.c.0.s8 %v427
        %v429 = vlaneseq
        %v430 = vshrl.u32 %v429, 7
        %v431 = vsub.s32 %v428, %v430
        %v432 = vrot.slane %v418, %v431
        %v433 = vcombine.low %v408, %v412
        %v434 = vcombine.high %v408, %v412
        %v436 = vunpack.c.l.s4 1983009808
        %v437 = vunpack.c.0.s8 %v436
        %v438 = vlaneseq
        %v439 = vshrl.u32 %v438, 7
        %v440 = vsub.s32 %v437, %v439
        %v441 = vrot.slane %v433, %v440
        %v443 = vunpack.c.l.s4 1983009808
        %v444 = vunpack.c.0.s8 %v443
        %v445 = vlaneseq
        %v446 = vshrl.u32 %v445, 7
        %v447 = vsub.s32 %v444, %v446
        %v448 = vrot.slane %v434, %v447
        %v449 = vcombine.low %v425, %v441
        %v450 = vcombine.high %v425, %v441
        %v452 = vunpack.c.l.s4 1934713408
        %v453 = vunpack.c.0.s8 %v452
        %v454 = vlaneseq
        %v455 = vshrl.u32 %v454, 7
        %v456 = vsub.s32 %v453, %v455
        %v457 = vrot.slane %v449, %v456
        %v459 = vunpack.c.l.s4 1934713408
        %v460 = vunpack.c.0.s8 %v459
        %v461 = vlaneseq
        %v462 = vshrl.u32 %v461, 7
        %v463 = vsub.s32 %v460, %v462
        %v464 = vrot.slane %v450, %v463
        %v465 = vcombine.low %v432, %v448
        %v466 = vcombine.high %v432, %v448
        %v468 = vunpack.c.l.s4 1934713408
        %v469 = vunpack.c.0.s8 %v468
        %v470 = vlaneseq
        %v471 = vshrl.u32 %v470, 7
        %v472 = vsub.s32 %v469, %v471
        %v473 = vrot.slane %v465, %v472
        %v475 = vunpack.c.l.s4 1934713408
        %v476 = vunpack.c.0.s8 %v475
        %v477 = vlaneseq
        %v478 = vshrl.u32 %v477, 7
        %v479 = vsub.s32 %v476, %v478
        %v480 = vrot.slane %v466, %v479
        %v481 = vcombine.high %v457, 0.0
        %v482 = vcombine.high %v464, 0.0
        %v483 = vcombine.high %v473, 0.0
        %v484 = vcombine.high %v480, 0.0
        %485 = vxpose.xlu0.b32.start [1/16] %v377, 128
        %486 = vxpose.xlu0.b32.cont [2/16] 0.0, 128
        %487 = vxpose.xlu0.b32.cont [3/16] 0.0, 128
        %488 = vxpose.xlu0.b32.cont [4/16] 0.0, 128
        %489 = vxpose.xlu0.b32.cont [5/16] 0.0, 128
        %490 = vxpose.xlu0.b32.cont [6/16] 0.0, 128
        %491 = vxpose.xlu0.b32.cont [7/16] 0.0, 128
        %492 = vxpose.xlu0.b32.cont [8/16] 0.0, 128
        %493 = vxpose.xlu0.b32.cont [9/16] 0.0, 128
        %494 = vxpose.xlu0.b32.cont [10/16] 0.0, 128
        %495 = vxpose.xlu0.b32.cont [11/16] 0.0, 128
        %496 = vxpose.xlu0.b32.cont [12/16] 0.0, 128
        %497 = vxpose.xlu0.b32.cont [13/16] 0.0, 128
        %498 = vxpose.xlu0.b32.cont [14/16] 0.0, 128
        %499 = vxpose.xlu0.b32.cont [15/16] 0.0, 128
        %500 = vxpose.xlu0.b32.end [16/16] 0.0, 128
        %v501 = vpop.trf.xlu0
        %v502 = vpop.trf.xlu0
        %v503 = vpop.trf.xlu0
        %v504 = vpop.trf.xlu0
        %v505 = vpop.trf.xlu0
        %v506 = vpop.trf.xlu0
        %v507 = vpop.trf.xlu0
        %v508 = vpop.trf.xlu0
        %v509 = vpop.trf.xlu0
        %v510 = vpop.trf.xlu0
        %v511 = vpop.trf.xlu0
        %v512 = vpop.trf.xlu0
        %v513 = vpop.trf.xlu0
        %v514 = vpop.trf.xlu0
        %v515 = vpop.trf.xlu0
        %v516 = vpop.trf.xlu0
        %517 = vxpose.xlu0.b32.start [1/16] %v401, 128
        %518 = vxpose.xlu0.b32.cont [2/16] 0.0, 128
        %519 = vxpose.xlu0.b32.cont [3/16] 0.0, 128
        %520 = vxpose.xlu0.b32.cont [4/16] 0.0, 128
        %521 = vxpose.xlu0.b32.cont [5/16] 0.0, 128
        %522 = vxpose.xlu0.b32.cont [6/16] 0.0, 128
        %523 = vxpose.xlu0.b32.cont [7/16] 0.0, 128
        %524 = vxpose.xlu0.b32.cont [8/16] 0.0, 128
        %525 = vxpose.xlu0.b32.cont [9/16] 0.0, 128
        %526 = vxpose.xlu0.b32.cont [10/16] 0.0, 128
        %527 = vxpose.xlu0.b32.cont [11/16] 0.0, 128
        %528 = vxpose.xlu0.b32.cont [12/16] 0.0, 128
        %529 = vxpose.xlu0.b32.cont [13/16] 0.0, 128
        %530 = vxpose.xlu0.b32.cont [14/16] 0.0, 128
        %531 = vxpose.xlu0.b32.cont [15/16] 0.0, 128
        %532 = vxpose.xlu0.b32.end [16/16] 0.0, 128
        %v533 = vpop.trf.xlu0
        %v534 = vpop.trf.xlu0
        %v535 = vpop.trf.xlu0
        %v536 = vpop.trf.xlu0
        %v537 = vpop.trf.xlu0
        %v538 = vpop.trf.xlu0
        %v539 = vpop.trf.xlu0
        %v540 = vpop.trf.xlu0
        %v541 = vpop.trf.xlu0
        %v542 = vpop.trf.xlu0
        %v543 = vpop.trf.xlu0
        %v544 = vpop.trf.xlu0
        %v545 = vpop.trf.xlu0
        %v546 = vpop.trf.xlu0
        %v547 = vpop.trf.xlu0
        %v548 = vpop.trf.xlu0
        %549 = vxpose.xlu0.b32.start [1/16] %v384, 128
        %550 = vxpose.xlu0.b32.cont [2/16] 0.0, 128
        %551 = vxpose.xlu0.b32.cont [3/16] 0.0, 128
        %552 = vxpose.xlu0.b32.cont [4/16] 0.0, 128
        %553 = vxpose.xlu0.b32.cont [5/16] 0.0, 128
        %554 = vxpose.xlu0.b32.cont [6/16] 0.0, 128
        %555 = vxpose.xlu0.b32.cont [7/16] 0.0, 128
        %556 = vxpose.xlu0.b32.cont [8/16] 0.0, 128
        %557 = vxpose.xlu0.b32.cont [9/16] 0.0, 128
        %558 = vxpose.xlu0.b32.cont [10/16] 0.0, 128
        %559 = vxpose.xlu0.b32.cont [11/16] 0.0, 128
        %560 = vxpose.xlu0.b32.cont [12/16] 0.0, 128
        %561 = vxpose.xlu0.b32.cont [13/16] 0.0, 128
        %562 = vxpose.xlu0.b32.cont [14/16] 0.0, 128
        %563 = vxpose.xlu0.b32.cont [15/16] 0.0, 128
        %564 = vxpose.xlu0.b32.end [16/16] 0.0, 128
        %v565 = vpop.trf.xlu0
        %v566 = vpop.trf.xlu0
        %v567 = vpop.trf.xlu0
        %v568 = vpop.trf.xlu0
        %v569 = vpop.trf.xlu0
        %v570 = vpop.trf.xlu0
        %v571 = vpop.trf.xlu0
        %v572 = vpop.trf.xlu0
        %v573 = vpop.trf.xlu0
        %v574 = vpop.trf.xlu0
        %v575 = vpop.trf.xlu0
        %v576 = vpop.trf.xlu0
        %v577 = vpop.trf.xlu0
        %v578 = vpop.trf.xlu0
        %v579 = vpop.trf.xlu0
        %v580 = vpop.trf.xlu0
        %581 = vxpose.xlu0.b32.start [1/16] %v402, 128
        %582 = vxpose.xlu0.b32.cont [2/16] 0.0, 128
        %583 = vxpose.xlu0.b32.cont [3/16] 0.0, 128
        %584 = vxpose.xlu0.b32.cont [4/16] 0.0, 128
        %585 = vxpose.xlu0.b32.cont [5/16] 0.0, 128
        %586 = vxpose.xlu0.b32.cont [6/16] 0.0, 128
        %587 = vxpose.xlu0.b32.cont [7/16] 0.0, 128
        %588 = vxpose.xlu0.b32.cont [8/16] 0.0, 128
        %589 = vxpose.xlu0.b32.cont [9/16] 0.0, 128
        %590 = vxpose.xlu0.b32.cont [10/16] 0.0, 128
        %591 = vxpose.xlu0.b32.cont [11/16] 0.0, 128
        %592 = vxpose.xlu0.b32.cont [12/16] 0.0, 128
        %593 = vxpose.xlu0.b32.cont [13/16] 0.0, 128
        %594 = vxpose.xlu0.b32.cont [14/16] 0.0, 128
        %595 = vxpose.xlu0.b32.cont [15/16] 0.0, 128
        %596 = vxpose.xlu0.b32.end [16/16] 0.0, 128
        %v597 = vpop.trf.xlu0
        %v598 = vpop.trf.xlu0
        %v599 = vpop.trf.xlu0
        %v600 = vpop.trf.xlu0
        %v601 = vpop.trf.xlu0
        %v602 = vpop.trf.xlu0
        %v603 = vpop.trf.xlu0
        %v604 = vpop.trf.xlu0
        %v605 = vpop.trf.xlu0
        %v606 = vpop.trf.xlu0
        %v607 = vpop.trf.xlu0
        %v608 = vpop.trf.xlu0
        %v609 = vpop.trf.xlu0
        %v610 = vpop.trf.xlu0
        %v611 = vpop.trf.xlu0
        %v612 = vpop.trf.xlu0
        %613 = vxpose.xlu0.b32.start [1/16] %v393, 128
        %614 = vxpose.xlu0.b32.cont [2/16] 0.0, 128
        %615 = vxpose.xlu0.b32.cont [3/16] 0.0, 128
        %616 = vxpose.xlu0.b32.cont [4/16] 0.0, 128
        %617 = vxpose.xlu0.b32.cont [5/16] 0.0, 128
        %618 = vxpose.xlu0.b32.cont [6/16] 0.0, 128
        %619 = vxpose.xlu0.b32.cont [7/16] 0.0, 128
        %620 = vxpose.xlu0.b32.cont [8/16] 0.0, 128
        %621 = vxpose.xlu0.b32.cont [9/16] 0.0, 128
        %622 = vxpose.xlu0.b32.cont [10/16] 0.0, 128
        %623 = vxpose.xlu0.b32.cont [11/16] 0.0, 128
        %624 = vxpose.xlu0.b32.cont [12/16] 0.0, 128
        %625 = vxpose.xlu0.b32.cont [13/16] 0.0, 128
        %626 = vxpose.xlu0.b32.cont [14/16] 0.0, 128
        %627 = vxpose.xlu0.b32.cont [15/16] 0.0, 128
        %628 = vxpose.xlu0.b32.end [16/16] 0.0, 128
        %v629 = vpop.trf.xlu0
        %v630 = vpop.trf.xlu0
        %v631 = vpop.trf.xlu0
        %v632 = vpop.trf.xlu0
        %v633 = vpop.trf.xlu0
        %v634 = vpop.trf.xlu0
        %v635 = vpop.trf.xlu0
        %v636 = vpop.trf.xlu0
        %v637 = vpop.trf.xlu0
        %v638 = vpop.trf.xlu0
        %v639 = vpop.trf.xlu0
        %v640 = vpop.trf.xlu0
        %v641 = vpop.trf.xlu0
        %v642 = vpop.trf.xlu0
        %v643 = vpop.trf.xlu0
        %v644 = vpop.trf.xlu0
        %645 = vxpose.xlu0.b32.start [1/16] %v403, 128
        %646 = vxpose.xlu0.b32.cont [2/16] 0.0, 128
        %647 = vxpose.xlu0.b32.cont [3/16] 0.0, 128
        %648 = vxpose.xlu0.b32.cont [4/16] 0.0, 128
        %649 = vxpose.xlu0.b32.cont [5/16] 0.0, 128
        %650 = vxpose.xlu0.b32.cont [6/16] 0.0, 128
        %651 = vxpose.xlu0.b32.cont [7/16] 0.0, 128
        %652 = vxpose.xlu0.b32.cont [8/16] 0.0, 128
        %653 = vxpose.xlu0.b32.cont [9/16] 0.0, 128
        %654 = vxpose.xlu0.b32.cont [10/16] 0.0, 128
        %655 = vxpose.xlu0.b32.cont [11/16] 0.0, 128
        %656 = vxpose.xlu0.b32.cont [12/16] 0.0, 128
        %657 = vxpose.xlu0.b32.cont [13/16] 0.0, 128
        %658 = vxpose.xlu0.b32.cont [14/16] 0.0, 128
        %659 = vxpose.xlu0.b32.cont [15/16] 0.0, 128
        %660 = vxpose.xlu0.b32.end [16/16] 0.0, 128
        %v661 = vpop.trf.xlu0
        %v662 = vpop.trf.xlu0
        %v663 = vpop.trf.xlu0
        %v664 = vpop.trf.xlu0
        %v665 = vpop.trf.xlu0
        %v666 = vpop.trf.xlu0
        %v667 = vpop.trf.xlu0
        %v668 = vpop.trf.xlu0
        %v669 = vpop.trf.xlu0
        %v670 = vpop.trf.xlu0
        %v671 = vpop.trf.xlu0
        %v672 = vpop.trf.xlu0
        %v673 = vpop.trf.xlu0
        %v674 = vpop.trf.xlu0
        %v675 = vpop.trf.xlu0
        %v676 = vpop.trf.xlu0
        %677 = vxpose.xlu0.b32.start [1/16] %v400, 128
        %678 = vxpose.xlu0.b32.cont [2/16] 0.0, 128
        %679 = vxpose.xlu0.b32.cont [3/16] 0.0, 128
        %680 = vxpose.xlu0.b32.cont [4/16] 0.0, 128
        %681 = vxpose.xlu0.b32.cont [5/16] 0.0, 128
        %682 = vxpose.xlu0.b32.cont [6/16] 0.0, 128
        %683 = vxpose.xlu0.b32.cont [7/16] 0.0, 128
        %684 = vxpose.xlu0.b32.cont [8/16] 0.0, 128
        %685 = vxpose.xlu0.b32.cont [9/16] 0.0, 128
        %686 = vxpose.xlu0.b32.cont [10/16] 0.0, 128
        %687 = vxpose.xlu0.b32.cont [11/16] 0.0, 128
        %688 = vxpose.xlu0.b32.cont [12/16] 0.0, 128
        %689 = vxpose.xlu0.b32.cont [13/16] 0.0, 128
        %690 = vxpose.xlu0.b32.cont [14/16] 0.0, 128
        %691 = vxpose.xlu0.b32.cont [15/16] 0.0, 128
        %692 = vxpose.xlu0.b32.end [16/16] 0.0, 128
        %v693 = vpop.trf.xlu0
        %v694 = vpop.trf.xlu0
        %v695 = vpop.trf.xlu0
        %v696 = vpop.trf.xlu0
        %v697 = vpop.trf.xlu0
        %v698 = vpop.trf.xlu0
        %v699 = vpop.trf.xlu0
        %v700 = vpop.trf.xlu0
        %v701 = vpop.trf.xlu0
        %v702 = vpop.trf.xlu0
        %v703 = vpop.trf.xlu0
        %v704 = vpop.trf.xlu0
        %v705 = vpop.trf.xlu0
        %v706 = vpop.trf.xlu0
        %v707 = vpop.trf.xlu0
        %v708 = vpop.trf.xlu0
        %709 = vxpose.xlu0.b32.start [1/16] %v404, 128
        %710 = vxpose.xlu0.b32.cont [2/16] 0.0, 128
        %711 = vxpose.xlu0.b32.cont [3/16] 0.0, 128
        %712 = vxpose.xlu0.b32.cont [4/16] 0.0, 128
        %713 = vxpose.xlu0.b32.cont [5/16] 0.0, 128
        %714 = vxpose.xlu0.b32.cont [6/16] 0.0, 128
        %715 = vxpose.xlu0.b32.cont [7/16] 0.0, 128
        %716 = vxpose.xlu0.b32.cont [8/16] 0.0, 128
        %717 = vxpose.xlu0.b32.cont [9/16] 0.0, 128
        %718 = vxpose.xlu0.b32.cont [10/16] 0.0, 128
        %719 = vxpose.xlu0.b32.cont [11/16] 0.0, 128
        %720 = vxpose.xlu0.b32.cont [12/16] 0.0, 128
        %721 = vxpose.xlu0.b32.cont [13/16] 0.0, 128
        %722 = vxpose.xlu0.b32.cont [14/16] 0.0, 128
        %723 = vxpose.xlu0.b32.cont [15/16] 0.0, 128
        %724 = vxpose.xlu0.b32.end [16/16] 0.0, 128
        %v725 = vpop.trf.xlu0
        %v726 = vpop.trf.xlu0
        %v727 = vpop.trf.xlu0
        %v728 = vpop.trf.xlu0
        %v729 = vpop.trf.xlu0
        %v730 = vpop.trf.xlu0
        %v731 = vpop.trf.xlu0
        %v732 = vpop.trf.xlu0
        %v733 = vpop.trf.xlu0
        %v734 = vpop.trf.xlu0
        %v735 = vpop.trf.xlu0
        %v736 = vpop.trf.xlu0
        %v737 = vpop.trf.xlu0
        %v738 = vpop.trf.xlu0
        %v739 = vpop.trf.xlu0
        %v740 = vpop.trf.xlu0
        %v741 = vcombine.low %v501, %v565
        %v742 = vcombine.high %v501, %v565
        %v744 = vunpack.c.l.s4 1983009808
        %v745 = vunpack.c.0.s8 %v744
        %v746 = vlaneseq
        %v747 = vshrl.u32 %v746, 7
        %v748 = vsub.s32 %v745, %v747
        %v749 = vrot.slane %v741, %v748
        %v751 = vunpack.c.l.s4 1983009808
        %v752 = vunpack.c.0.s8 %v751
        %v753 = vlaneseq
        %v754 = vshrl.u32 %v753, 7
        %v755 = vsub.s32 %v752, %v754
        %v756 = vrot.slane %v742, %v755
        %v757 = vcombine.low %v533, %v597
        %v758 = vcombine.high %v533, %v597
        %v760 = vunpack.c.l.s4 1983009808
        %v761 = vunpack.c.0.s8 %v760
        %v762 = vlaneseq
        %v763 = vshrl.u32 %v762, 7
        %v764 = vsub.s32 %v761, %v763
        %v765 = vrot.slane %v757, %v764
        %v767 = vunpack.c.l.s4 1983009808
        %v768 = vunpack.c.0.s8 %v767
        %v769 = vlaneseq
        %v770 = vshrl.u32 %v769, 7
        %v771 = vsub.s32 %v768, %v770
        %v772 = vrot.slane %v758, %v771
        %v773 = vcombine.low %v629, %v693
        %v774 = vcombine.high %v629, %v693
        %v776 = vunpack.c.l.s4 1983009808
        %v777 = vunpack.c.0.s8 %v776
        %v778 = vlaneseq
        %v779 = vshrl.u32 %v778, 7
        %v780 = vsub.s32 %v777, %v779
        %v781 = vrot.slane %v773, %v780
        %v783 = vunpack.c.l.s4 1983009808
        %v784 = vunpack.c.0.s8 %v783
        %v785 = vlaneseq
        %v786 = vshrl.u32 %v785, 7
        %v787 = vsub.s32 %v784, %v786
        %v788 = vrot.slane %v774, %v787
        %v789 = vcombine.low %v661, %v725
        %v790 = vcombine.high %v661, %v725
        %v792 = vunpack.c.l.s4 1983009808
        %v793 = vunpack.c.0.s8 %v792
        %v794 = vlaneseq
        %v795 = vshrl.u32 %v794, 7
        %v796 = vsub.s32 %v793, %v795
        %v797 = vrot.slane %v789, %v796
        %v799 = vunpack.c.l.s4 1983009808
        %v800 = vunpack.c.0.s8 %v799
        %v801 = vlaneseq
        %v802 = vshrl.u32 %v801, 7
        %v803 = vsub.s32 %v800, %v802
        %v804 = vrot.slane %v790, %v803
        %v805 = vcombine.low %v749, %v765
        %v806 = vcombine.high %v749, %v765
        %v808 = vunpack.c.l.s4 1934713408
        %v809 = vunpack.c.0.s8 %v808
        %v810 = vlaneseq
        %v811 = vshrl.u32 %v810, 7
        %v812 = vsub.s32 %v809, %v811
        %v813 = vrot.slane %v805, %v812
        %v815 = vunpack.c.l.s4 1934713408
        %v816 = vunpack.c.0.s8 %v815
        %v817 = vlaneseq
        %v818 = vshrl.u32 %v817, 7
        %v819 = vsub.s32 %v816, %v818
        %v820 = vrot.slane %v806, %v819
        %v821 = vcombine.low %v756, %v772
        %v822 = vcombine.high %v756, %v772
        %v824 = vunpack.c.l.s4 1934713408
        %v825 = vunpack.c.0.s8 %v824
        %v826 = vlaneseq
        %v827 = vshrl.u32 %v826, 7
        %v828 = vsub.s32 %v825, %v827
        %v829 = vrot.slane %v821, %v828
        %v831 = vunpack.c.l.s4 1934713408
        %v832 = vunpack.c.0.s8 %v831
        %v833 = vlaneseq
        %v834 = vshrl.u32 %v833, 7
        %v835 = vsub.s32 %v832, %v834
        %v836 = vrot.slane %v822, %v835
        %v837 = vcombine.low %v781, %v797
        %v838 = vcombine.high %v781, %v797
        %v840 = vunpack.c.l.s4 1934713408
        %v841 = vunpack.c.0.s8 %v840
        %v842 = vlaneseq
        %v843 = vshrl.u32 %v842, 7
        %v844 = vsub.s32 %v841, %v843
        %v845 = vrot.slane %v837, %v844
        %v847 = vunpack.c.l.s4 1934713408
        %v848 = vunpack.c.0.s8 %v847
        %v849 = vlaneseq
        %v850 = vshrl.u32 %v849, 7
        %v851 = vsub.s32 %v848, %v850
        %v852 = vrot.slane %v838, %v851
        %v853 = vcombine.low %v788, %v804
        %v854 = vcombine.high %v788, %v804
        %v856 = vunpack.c.l.s4 1934713408
        %v857 = vunpack.c.0.s8 %v856
        %v858 = vlaneseq
        %v859 = vshrl.u32 %v858, 7
        %v860 = vsub.s32 %v857, %v859
        %v861 = vrot.slane %v853, %v860
        %v863 = vunpack.c.l.s4 1934713408
        %v864 = vunpack.c.0.s8 %v863
        %v865 = vlaneseq
        %v866 = vshrl.u32 %v865, 7
        %v867 = vsub.s32 %v864, %v866
        %v868 = vrot.slane %v854, %v867
        %v869 = vcombine.low %v813, %v845
        %v870 = vcombine.high %v813, %v845
        %v871 = vcombine.low %v820, %v852
        %v872 = vcombine.high %v820, %v852
        %v873 = vcombine.low %v829, %v861
        %v874 = vcombine.high %v829, %v861
        %v875 = vcombine.low %v836, %v868
        %v876 = vcombine.high %v836, %v868
        %877 = vxpose.xlu0.b32.start [1/16] %v869, 128
        %878 = vxpose.xlu0.b32.cont [2/16] 0.0, 128
        %879 = vxpose.xlu0.b32.cont [3/16] 0.0, 128
        %880 = vxpose.xlu0.b32.cont [4/16] 0.0, 128
        %881 = vxpose.xlu0.b32.cont [5/16] 0.0, 128
        %882 = vxpose.xlu0.b32.cont [6/16] 0.0, 128
        %883 = vxpose.xlu0.b32.cont [7/16] 0.0, 128
        %884 = vxpose.xlu0.b32.cont [8/16] 0.0, 128
        %885 = vxpose.xlu0.b32.cont [9/16] 0.0, 128
        %886 = vxpose.xlu0.b32.cont [10/16] 0.0, 128
        %887 = vxpose.xlu0.b32.cont [11/16] 0.0, 128
        %888 = vxpose.xlu0.b32.cont [12/16] 0.0, 128
        %889 = vxpose.xlu0.b32.cont [13/16] 0.0, 128
        %890 = vxpose.xlu0.b32.cont [14/16] 0.0, 128
        %891 = vxpose.xlu0.b32.cont [15/16] 0.0, 128
        %892 = vxpose.xlu0.b32.end [16/16] 0.0, 128
        %v893 = vpop.trf.xlu0
        %v894 = vpop.trf.xlu0
        %v895 = vpop.trf.xlu0
        %v896 = vpop.trf.xlu0
        %v897 = vpop.trf.xlu0
        %v898 = vpop.trf.xlu0
        %v899 = vpop.trf.xlu0
        %v900 = vpop.trf.xlu0
        %v901 = vpop.trf.xlu0
        %v902 = vpop.trf.xlu0
        %v903 = vpop.trf.xlu0
        %v904 = vpop.trf.xlu0
        %v905 = vpop.trf.xlu0
        %v906 = vpop.trf.xlu0
        %v907 = vpop.trf.xlu0
        %v908 = vpop.trf.xlu0
        %909 = vxpose.xlu0.b32.start [1/16] %v870, 128
        %910 = vxpose.xlu0.b32.cont [2/16] 0.0, 128
        %911 = vxpose.xlu0.b32.cont [3/16] 0.0, 128
        %912 = vxpose.xlu0.b32.cont [4/16] 0.0, 128
        %913 = vxpose.xlu0.b32.cont [5/16] 0.0, 128
        %914 = vxpose.xlu0.b32.cont [6/16] 0.0, 128
        %915 = vxpose.xlu0.b32.cont [7/16] 0.0, 128
        %916 = vxpose.xlu0.b32.cont [8/16] 0.0, 128
        %917 = vxpose.xlu0.b32.cont [9/16] 0.0, 128
        %918 = vxpose.xlu0.b32.cont [10/16] 0.0, 128
        %919 = vxpose.xlu0.b32.cont [11/16] 0.0, 128
        %920 = vxpose.xlu0.b32.cont [12/16] 0.0, 128
        %921 = vxpose.xlu0.b32.cont [13/16] 0.0, 128
        %922 = vxpose.xlu0.b32.cont [14/16] 0.0, 128
        %923 = vxpose.xlu0.b32.cont [15/16] 0.0, 128
        %924 = vxpose.xlu0.b32.end [16/16] 0.0, 128
        %v925 = vpop.trf.xlu0
        %v926 = vpop.trf.xlu0
        %v927 = vpop.trf.xlu0
        %v928 = vpop.trf.xlu0
        %v929 = vpop.trf.xlu0
        %v930 = vpop.trf.xlu0
        %v931 = vpop.trf.xlu0
        %v932 = vpop.trf.xlu0
        %v933 = vpop.trf.xlu0
        %v934 = vpop.trf.xlu0
        %v935 = vpop.trf.xlu0
        %v936 = vpop.trf.xlu0
        %v937 = vpop.trf.xlu0
        %v938 = vpop.trf.xlu0
        %v939 = vpop.trf.xlu0
        %v940 = vpop.trf.xlu0
        %941 = vxpose.xlu0.b32.start [1/16] %v871, 128
        %942 = vxpose.xlu0.b32.cont [2/16] 0.0, 128
        %943 = vxpose.xlu0.b32.cont [3/16] 0.0, 128
        %944 = vxpose.xlu0.b32.cont [4/16] 0.0, 128
        %945 = vxpose.xlu0.b32.cont [5/16] 0.0, 128
        %946 = vxpose.xlu0.b32.cont [6/16] 0.0, 128
        %947 = vxpose.xlu0.b32.cont [7/16] 0.0, 128
        %948 = vxpose.xlu0.b32.cont [8/16] 0.0, 128
        %949 = vxpose.xlu0.b32.cont [9/16] 0.0, 128
        %950 = vxpose.xlu0.b32.cont [10/16] 0.0, 128
        %951 = vxpose.xlu0.b32.cont [11/16] 0.0, 128
        %952 = vxpose.xlu0.b32.cont [12/16] 0.0, 128
        %953 = vxpose.xlu0.b32.cont [13/16] 0.0, 128
        %954 = vxpose.xlu0.b32.cont [14/16] 0.0, 128
        %955 = vxpose.xlu0.b32.cont [15/16] 0.0, 128
        %956 = vxpose.xlu0.b32.end [16/16] 0.0, 128
        %v957 = vpop.trf.xlu0
        %v958 = vpop.trf.xlu0
        %v959 = vpop.trf.xlu0
        %v960 = vpop.trf.xlu0
        %v961 = vpop.trf.xlu0
        %v962 = vpop.trf.xlu0
        %v963 = vpop.trf.xlu0
        %v964 = vpop.trf.xlu0
        %v965 = vpop.trf.xlu0
        %v966 = vpop.trf.xlu0
        %v967 = vpop.trf.xlu0
        %v968 = vpop.trf.xlu0
        %v969 = vpop.trf.xlu0
        %v970 = vpop.trf.xlu0
        %v971 = vpop.trf.xlu0
        %v972 = vpop.trf.xlu0
        %973 = vxpose.xlu0.b32.start [1/16] %v872, 128
        %974 = vxpose.xlu0.b32.cont [2/16] 0.0, 128
        %975 = vxpose.xlu0.b32.cont [3/16] 0.0, 128
        %976 = vxpose.xlu0.b32.cont [4/16] 0.0, 128
        %977 = vxpose.xlu0.b32.cont [5/16] 0.0, 128
        %978 = vxpose.xlu0.b32.cont [6/16] 0.0, 128
        %979 = vxpose.xlu0.b32.cont [7/16] 0.0, 128
        %980 = vxpose.xlu0.b32.cont [8/16] 0.0, 128
        %981 = vxpose.xlu0.b32.cont [9/16] 0.0, 128
        %982 = vxpose.xlu0.b32.cont [10/16] 0.0, 128
        %983 = vxpose.xlu0.b32.cont [11/16] 0.0, 128
        %984 = vxpose.xlu0.b32.cont [12/16] 0.0, 128
        %985 = vxpose.xlu0.b32.cont [13/16] 0.0, 128
        %986 = vxpose.xlu0.b32.cont [14/16] 0.0, 128
        %987 = vxpose.xlu0.b32.cont [15/16] 0.0, 128
        %988 = vxpose.xlu0.b32.end [16/16] 0.0, 128
        %v989 = vpop.trf.xlu0
        %v990 = vpop.trf.xlu0
        %v991 = vpop.trf.xlu0
        %v992 = vpop.trf.xlu0
        %v993 = vpop.trf.xlu0
        %v994 = vpop.trf.xlu0
        %v995 = vpop.trf.xlu0
        %v996 = vpop.trf.xlu0
        %v997 = vpop.trf.xlu0
        %v998 = vpop.trf.xlu0
        %v999 = vpop.trf.xlu0
        %v1000 = vpop.trf.xlu0
        %v1001 = vpop.trf.xlu0
        %v1002 = vpop.trf.xlu0
        %v1003 = vpop.trf.xlu0
        %v1004 = vpop.trf.xlu0
        %1005 = vxpose.xlu0.b32.start [1/16] %v873, 128
        %1006 = vxpose.xlu0.b32.cont [2/16] 0.0, 128
        %1007 = vxpose.xlu0.b32.cont [3/16] 0.0, 128
        %1008 = vxpose.xlu0.b32.cont [4/16] 0.0, 128
        %1009 = vxpose.xlu0.b32.cont [5/16] 0.0, 128
        %1010 = vxpose.xlu0.b32.cont [6/16] 0.0, 128
        %1011 = vxpose.xlu0.b32.cont [7/16] 0.0, 128
        %1012 = vxpose.xlu0.b32.cont [8/16] 0.0, 128
        %1013 = vxpose.xlu0.b32.cont [9/16] 0.0, 128
        %1014 = vxpose.xlu0.b32.cont [10/16] 0.0, 128
        %1015 = vxpose.xlu0.b32.cont [11/16] 0.0, 128
        %1016 = vxpose.xlu0.b32.cont [12/16] 0.0, 128
        %1017 = vxpose.xlu0.b32.cont [13/16] 0.0, 128
        %1018 = vxpose.xlu0.b32.cont [14/16] 0.0, 128
        %1019 = vxpose.xlu0.b32.cont [15/16] 0.0, 128
        %1020 = vxpose.xlu0.b32.end [16/16] 0.0, 128
        %v1021 = vpop.trf.xlu0
        %v1022 = vpop.trf.xlu0
        %v1023 = vpop.trf.xlu0
        %v1024 = vpop.trf.xlu0
        %v1025 = vpop.trf.xlu0
        %v1026 = vpop.trf.xlu0
        %v1027 = vpop.trf.xlu0
        %v1028 = vpop.trf.xlu0
        %v1029 = vpop.trf.xlu0
        %v1030 = vpop.trf.xlu0
        %v1031 = vpop.trf.xlu0
        %v1032 = vpop.trf.xlu0
        %v1033 = vpop.trf.xlu0
        %v1034 = vpop.trf.xlu0
        %v1035 = vpop.trf.xlu0
        %v1036 = vpop.trf.xlu0
        %1037 = vxpose.xlu0.b32.start [1/16] %v874, 128
        %1038 = vxpose.xlu0.b32.cont [2/16] 0.0, 128
        %1039 = vxpose.xlu0.b32.cont [3/16] 0.0, 128
        %1040 = vxpose.xlu0.b32.cont [4/16] 0.0, 128
        %1041 = vxpose.xlu0.b32.cont [5/16] 0.0, 128
        %1042 = vxpose.xlu0.b32.cont [6/16] 0.0, 128
        %1043 = vxpose.xlu0.b32.cont [7/16] 0.0, 128
        %1044 = vxpose.xlu0.b32.cont [8/16] 0.0, 128
        %1045 = vxpose.xlu0.b32.cont [9/16] 0.0, 128
        %1046 = vxpose.xlu0.b32.cont [10/16] 0.0, 128
        %1047 = vxpose.xlu0.b32.cont [11/16] 0.0, 128
        %1048 = vxpose.xlu0.b32.cont [12/16] 0.0, 128
        %1049 = vxpose.xlu0.b32.cont [13/16] 0.0, 128
        %1050 = vxpose.xlu0.b32.cont [14/16] 0.0, 128
        %1051 = vxpose.xlu0.b32.cont [15/16] 0.0, 128
        %1052 = vxpose.xlu0.b32.end [16/16] 0.0, 128
        %v1053 = vpop.trf.xlu0
        %v1054 = vpop.trf.xlu0
        %v1055 = vpop.trf.xlu0
        %v1056 = vpop.trf.xlu0
        %v1057 = vpop.trf.xlu0
        %v1058 = vpop.trf.xlu0
        %v1059 = vpop.trf.xlu0
        %v1060 = vpop.trf.xlu0
        %v1061 = vpop.trf.xlu0
        %v1062 = vpop.trf.xlu0
        %v1063 = vpop.trf.xlu0
        %v1064 = vpop.trf.xlu0
        %v1065 = vpop.trf.xlu0
        %v1066 = vpop.trf.xlu0
        %v1067 = vpop.trf.xlu0
        %v1068 = vpop.trf.xlu0
        %1069 = vxpose.xlu0.b32.start [1/16] %v875, 128
        %1070 = vxpose.xlu0.b32.cont [2/16] 0.0, 128
        %1071 = vxpose.xlu0.b32.cont [3/16] 0.0, 128
        %1072 = vxpose.xlu0.b32.cont [4/16] 0.0, 128
        %1073 = vxpose.xlu0.b32.cont [5/16] 0.0, 128
        %1074 = vxpose.xlu0.b32.cont [6/16] 0.0, 128
        %1075 = vxpose.xlu0.b32.cont [7/16] 0.0, 128
        %1076 = vxpose.xlu0.b32.cont [8/16] 0.0, 128
        %1077 = vxpose.xlu0.b32.cont [9/16] 0.0, 128
        %1078 = vxpose.xlu0.b32.cont [10/16] 0.0, 128
        %1079 = vxpose.xlu0.b32.cont [11/16] 0.0, 128
        %1080 = vxpose.xlu0.b32.cont [12/16] 0.0, 128
        %1081 = vxpose.xlu0.b32.cont [13/16] 0.0, 128
        %1082 = vxpose.xlu0.b32.cont [14/16] 0.0, 128
        %1083 = vxpose.xlu0.b32.cont [15/16] 0.0, 128
        %1084 = vxpose.xlu0.b32.end [16/16] 0.0, 128
        %v1085 = vpop.trf.xlu0
        %v1086 = vpop.trf.xlu0
        %v1087 = vpop.trf.xlu0
        %v1088 = vpop.trf.xlu0
        %v1089 = vpop.trf.xlu0
        %v1090 = vpop.trf.xlu0
        %v1091 = vpop.trf.xlu0
        %v1092 = vpop.trf.xlu0
        %v1093 = vpop.trf.xlu0
        %v1094 = vpop.trf.xlu0
        %v1095 = vpop.trf.xlu0
        %v1096 = vpop.trf.xlu0
        %v1097 = vpop.trf.xlu0
        %v1098 = vpop.trf.xlu0
        %v1099 = vpop.trf.xlu0
        %v1100 = vpop.trf.xlu0
        %1101 = vxpose.xlu0.b32.start [1/16] %v876, 128
        %1102 = vxpose.xlu0.b32.cont [2/16] 0.0, 128
        %1103 = vxpose.xlu0.b32.cont [3/16] 0.0, 128
        %1104 = vxpose.xlu0.b32.cont [4/16] 0.0, 128
        %1105 = vxpose.xlu0.b32.cont [5/16] 0.0, 128
        %1106 = vxpose.xlu0.b32.cont [6/16] 0.0, 128
        %1107 = vxpose.xlu0.b32.cont [7/16] 0.0, 128
        %1108 = vxpose.xlu0.b32.cont [8/16] 0.0, 128
        %1109 = vxpose.xlu0.b32.cont [9/16] 0.0, 128
        %1110 = vxpose.xlu0.b32.cont [10/16] 0.0, 128
        %1111 = vxpose.xlu0.b32.cont [11/16] 0.0, 128
        %1112 = vxpose.xlu0.b32.cont [12/16] 0.0, 128
        %1113 = vxpose.xlu0.b32.cont [13/16] 0.0, 128
        %1114 = vxpose.xlu0.b32.cont [14/16] 0.0, 128
        %1115 = vxpose.xlu0.b32.cont [15/16] 0.0, 128
        %1116 = vxpose.xlu0.b32.end [16/16] 0.0, 128
        %v1117 = vpop.trf.xlu0
        %v1118 = vpop.trf.xlu0
        %v1119 = vpop.trf.xlu0
        %v1120 = vpop.trf.xlu0
        %v1121 = vpop.trf.xlu0
        %v1122 = vpop.trf.xlu0
        %v1123 = vpop.trf.xlu0
        %v1124 = vpop.trf.xlu0
        %v1125 = vpop.trf.xlu0
        %v1126 = vpop.trf.xlu0
        %v1127 = vpop.trf.xlu0
        %v1128 = vpop.trf.xlu0
        %v1129 = vpop.trf.xlu0
        %v1130 = vpop.trf.xlu0
        %v1131 = vpop.trf.xlu0
        %v1132 = vpop.trf.xlu0
        %v1133 = vcombine.low %v893, %v957
        %v1135 = vunpack.c.l.s4 1983009808
        %v1136 = vunpack.c.0.s8 %v1135
        %v1137 = vlaneseq
        %v1138 = vshrl.u32 %v1137, 7
        %v1139 = vsub.s32 %v1136, %v1138
        %v1140 = vrot.slane %v1133, %v1139
        %v1141 = vcombine.low %v925, %v989
        %v1143 = vunpack.c.l.s4 1983009808
        %v1144 = vunpack.c.0.s8 %v1143
        %v1145 = vlaneseq
        %v1146 = vshrl.u32 %v1145, 7
        %v1147 = vsub.s32 %v1144, %v1146
        %v1148 = vrot.slane %v1141, %v1147
        %v1149 = vcombine.low %v1021, %v1085
        %v1151 = vunpack.c.l.s4 1983009808
        %v1152 = vunpack.c.0.s8 %v1151
        %v1153 = vlaneseq
        %v1154 = vshrl.u32 %v1153, 7
        %v1155 = vsub.s32 %v1152, %v1154
        %v1156 = vrot.slane %v1149, %v1155
        %v1157 = vcombine.low %v1053, %v1117
        %v1159 = vunpack.c.l.s4 1983009808
        %v1160 = vunpack.c.0.s8 %v1159
        %v1161 = vlaneseq
        %v1162 = vshrl.u32 %v1161, 7
        %v1163 = vsub.s32 %v1160, %v1162
        %v1164 = vrot.slane %v1157, %v1163
        %v1165 = vcombine.low %v1140, %v1148
        %v1166 = vcombine.high %v1140, %v1148
        %v1168 = vunpack.c.l.s4 1934713408
        %v1169 = vunpack.c.0.s8 %v1168
        %v1170 = vlaneseq
        %v1171 = vshrl.u32 %v1170, 7
        %v1172 = vsub.s32 %v1169, %v1171
        %v1173 = vrot.slane %v1165, %v1172
        %v1175 = vunpack.c.l.s4 1934713408
        %v1176 = vunpack.c.0.s8 %v1175
        %v1177 = vlaneseq
        %v1178 = vshrl.u32 %v1177, 7
        %v1179 = vsub.s32 %v1176, %v1178
        %v1180 = vrot.slane %v1166, %v1179
        %v1181 = vcombine.low %v1156, %v1164
        %v1182 = vcombine.high %v1156, %v1164
        %v1184 = vunpack.c.l.s4 1934713408
        %v1185 = vunpack.c.0.s8 %v1184
        %v1186 = vlaneseq
        %v1187 = vshrl.u32 %v1186, 7
        %v1188 = vsub.s32 %v1185, %v1187
        %v1189 = vrot.slane %v1181, %v1188
        %v1191 = vunpack.c.l.s4 1934713408
        %v1192 = vunpack.c.0.s8 %v1191
        %v1193 = vlaneseq
        %v1194 = vshrl.u32 %v1193, 7
        %v1195 = vsub.s32 %v1192, %v1194
        %v1196 = vrot.slane %v1182, %v1195
        %v1197 = vcombine.low %v1173, %v1189
        %v1198 = vcombine.high %v1173, %v1189
        %v1199 = vcombine.low %v1180, %v1196
        %v1200 = vcombine.high %v1180, %v1196
        %v1201 = vpack.c.bf16 %v1197, %v1197
        %v1202 = vpack.c.bf16 %v1198, %v1198
        %v1203 = vpack.c.bf16 %v1199, %v1199
        %v1204 = vpack.c.bf16 %v1200, %v1200
        %vm1205 = vcmask 60416
        %1206 = vst.msk [vmem:[%s250] sm:$0xf] %vm1205, %v1201
        %1207 = vst.msk [vmem:[%s250 + $0x4] sm:$0xf] %vm1205, %v1202
        %1208 = vst.msk [vmem:[%s250 + $0x8] sm:$0xf] %vm1205, %v1203
        %1209 = vst.msk [vmem:[%s250 + $0xc] sm:$0xf] %vm1205, %v1204
        %v1210 = vcombine.low %v457, %v464
        %v1212 = vunpack.c.l.s4 1983009808
        %v1213 = vunpack.c.0.s8 %v1212
        %v1214 = vlaneseq
        %v1215 = vshrl.u32 %v1214, 7
        %v1216 = vsub.s32 %v1213, %v1215
        %v1217 = vrot.slane %v1210, %v1216
        %v1218 = vcombine.low %v481, %v482
        %v1220 = vunpack.c.l.s4 1983009808
        %v1221 = vunpack.c.0.s8 %v1220
        %v1222 = vlaneseq
        %v1223 = vshrl.u32 %v1222, 7
        %v1224 = vsub.s32 %v1221, %v1223
        %v1225 = vrot.slane %v1218, %v1224
        %v1226 = vcombine.low %v473, %v480
        %v1228 = vunpack.c.l.s4 1983009808
        %v1229 = vunpack.c.0.s8 %v1228
        %v1230 = vlaneseq
        %v1231 = vshrl.u32 %v1230, 7
        %v1232 = vsub.s32 %v1229, %v1231
        %v1233 = vrot.slane %v1226, %v1232
        %v1234 = vcombine.low %v483, %v484
        %v1236 = vunpack.c.l.s4 1983009808
        %v1237 = vunpack.c.0.s8 %v1236
        %v1238 = vlaneseq
        %v1239 = vshrl.u32 %v1238, 7
        %v1240 = vsub.s32 %v1237, %v1239
        %v1241 = vrot.slane %v1234, %v1240
        %v1242 = vcombine.low %v1217, %v1225
        %v1243 = vcombine.high %v1217, %v1225
        %v1245 = vunpack.c.l.s4 1934713408
        %v1246 = vunpack.c.0.s8 %v1245
        %v1247 = vlaneseq
        %v1248 = vshrl.u32 %v1247, 7
        %v1249 = vsub.s32 %v1246, %v1248
        %v1250 = vrot.slane %v1242, %v1249
        %v1252 = vunpack.c.l.s4 1934713408
        %v1253 = vunpack.c.0.s8 %v1252
        %v1254 = vlaneseq
        %v1255 = vshrl.u32 %v1254, 7
        %v1256 = vsub.s32 %v1253, %v1255
        %v1257 = vrot.slane %v1243, %v1256
        %v1258 = vcombine.low %v1233, %v1241
        %v1259 = vcombine.high %v1233, %v1241
        %v1261 = vunpack.c.l.s4 1934713408
        %v1262 = vunpack.c.0.s8 %v1261
        %v1263 = vlaneseq
        %v1264 = vshrl.u32 %v1263, 7
        %v1265 = vsub.s32 %v1262, %v1264
        %v1266 = vrot.slane %v1258, %v1265
        %v1268 = vunpack.c.l.s4 1934713408
        %v1269 = vunpack.c.0.s8 %v1268
        %v1270 = vlaneseq
        %v1271 = vshrl.u32 %v1270, 7
        %v1272 = vsub.s32 %v1269, %v1271
        %v1273 = vrot.slane %v1259, %v1272
        %v1274 = vcombine.low %v1250, %v1266
        %v1275 = vcombine.high %v1250, %v1266
        %v1276 = vcombine.low %v1257, %v1273
        %v1277 = vcombine.high %v1257, %v1273
        %v1278 = vpack.c.bf16 %v1274, %v1274
        %v1279 = vpack.c.bf16 %v1275, %v1275
        %v1280 = vpack.c.bf16 %v1276, %v1276
        %v1281 = vpack.c.bf16 %v1277, %v1277
        %1282 = vst.msk [vmem:[%s257] sm:$0xf] %vm1205, %v1278
        %1283 = vst.msk [vmem:[%s257 + $0x4] sm:$0xf] %vm1205, %v1279
        %1284 = vst.msk [vmem:[%s257 + $0x8] sm:$0xf] %vm1205, %v1280
        %1285 = vst.msk [vmem:[%s257 + $0xc] sm:$0xf] %vm1205, %v1281
        %s1286 = sand.u32 %s118, 1
        %s1287 = scalar_lea.sflag [#allocation4], %s1286
        %s1288 = sand.u32 %s118, 1
        %s1289 = smul.addr %s1288, 16
        %s1290 = scalar_lea.vmem [#allocation7], %s1289
        %s1291 = sand.u32 %s146, 1
        %s1292 = scalar_lea.sflag [#allocation9], %s1291
        %s1293 = sand.u32 %s146, 1
        %s1294 = smul.addr %s1293, 16
        %s1295 = scalar_lea.vmem [#allocation8], %s1294
        // Predicated region
        $region41: #{tpu_custom_call.1} parent=31 // pred_check
          %p1296 = pneg %p128
        $region42: #{tpu_custom_call.1} parent=31 // pred_check_branch
          %1298 = sbr.rel (%p1296) target = $region44
        $region43: #{tpu_custom_call.1} parent=31 // pred_region
          %s1300 = ssub.s32 256, 256
          %1301 = vsyncadd %s1287, %s1300
          %s1302 = smul.addr %s30, 4
          %s1303 = sadd.s32 %s31, %s1302
          %s1304 = smul.addr %s1303, 64
          %s1305 = scalar_lea.hbm %s3, %s1304
          %s1306 = sshll.u32 %s1290, 4
          %s1307 = int_to_ptr.vmem [resolvable:$true] %s1306
          %1312 = dma.vmem_to_hbm [thread:$0]  %s1307, 256, %s1305, %s1287, 64, 64, 4
        $region44: #{tpu_custom_call.1} parent=31 // pred_fallthru
          _
        // Predicated region
        $region45: #{tpu_custom_call.1} parent=31 // pred_check
          %p1313 = pneg %p156
        $region46: #{tpu_custom_call.1} parent=31 // pred_check_branch
          %1315 = sbr.rel (%p1313) target = $region48
        $region47: #{tpu_custom_call.1} parent=31 // pred_region
          %s1317 = ssub.s32 256, 256
          %1318 = vsyncadd %s1292, %s1317
          %s1319 = smul.addr %s30, 4
          %s1320 = sadd.s32 %s31, %s1319
          %s1321 = smul.addr %s1320, 64
          %s1322 = scalar_lea.hbm %s4, %s1321
          %s1323 = sshll.u32 %s1295, 4
          %s1324 = int_to_ptr.vmem [resolvable:$true] %s1323
          %1329 = dma.vmem_to_hbm [thread:$0]  %s1324, 256, %s1322, %s1292, 64, 64, 4
        $region48: #{tpu_custom_call.1} parent=31 // pred_fallthru
          _
      $region32: #{tpu_custom_call.1} parent=5 // pred_fallthru
        _
      %p1330 = scmp.le.s32.totalorder 2, %s21
      // Predicated region
      $region49: #{tpu_custom_call.1} parent=5 // pred_check
        %p1331 = pneg %p1330
      $region50: #{tpu_custom_call.1} parent=5 // pred_check_branch
        %1333 = sbr.rel (%p1331) target = $region52
      $region51: #{tpu_custom_call.1} parent=5 // pred_region
        %s1334 = ssub.s32 %s21, 2
        // Predicated region
        $region53: #{tpu_custom_call.1} parent=51 // pred_check
          %p1335 = pneg %p134
        $region54: #{tpu_custom_call.1} parent=51 // pred_check_branch
          %1337 = sbr.rel (%p1335) target = $region56
        $region55: #{tpu_custom_call.1} parent=51 // pred_region
          %s1338 = sand.u32 %s119, 1
          %s1339 = scalar_lea.sflag [#allocation4], %s1338
          %s1340 = sand.u32 %s119, 1
          %s1341 = smul.addr %s1340, 16
          %s1342 = scalar_lea.vmem [#allocation7], %s1341
          %1343 = dma.done %s1339, 256
        $region56: #{tpu_custom_call.1} parent=51 // pred_fallthru
          _
        // Predicated region
        $region57: #{tpu_custom_call.1} parent=51 // pred_check
          %p1344 = pneg %p162
        $region58: #{tpu_custom_call.1} parent=51 // pred_check_branch
          %1346 = sbr.rel (%p1344) target = $region60
        $region59: #{tpu_custom_call.1} parent=51 // pred_region
          %s1347 = sand.u32 %s147, 1
          %s1348 = scalar_lea.sflag [#allocation9], %s1347
          %s1349 = sand.u32 %s147, 1
          %s1350 = smul.addr %s1349, 16
          %s1351 = scalar_lea.vmem [#allocation8], %s1350
          %1352 = dma.done %s1348, 256
        $region60: #{tpu_custom_call.1} parent=51 // pred_fallthru
          _
      $region52: #{tpu_custom_call.1} parent=5 // pred_fallthru
        _
    $region6: #{tpu_custom_call.1} parent=1 // loop_footer
      %s25 = sadd.s32 1, %s21
    $region7: #{tpu_custom_call.1} parent=1 // loop_footer_branch
      %20 = sbr.rel target = $region3
    $region8: #{tpu_custom_call.1} parent=1 // loop_exit
      _
    %1353 = vsyncpa [#allocation3], 1
    %s1354 = scalar_lea.sflag [#allocation3], 1
    %1355 = vsyncpa %s1354, 1
    %1356 = vsyncpa [#allocation6], 1
    %1357 = vsyncpa [#allocation4], 1
    %s1358 = scalar_lea.sflag [#allocation4], 1
    %1359 = vsyncpa %s1358, 1
    %1360 = vsyncpa [#allocation9], 1
    %s1361 = scalar_lea.sflag [#allocation9], 1
    %1362 = vsyncpa %s1361, 1

// kernel: tpu_custom_call.1
$region0: #{tpu_custom_call.1}
  #allocation0 [shape = 'u32[]', space=smem, size = 0x4, offset = 0x4, fixed_abs, tag = 'smem constant byte address 0x4 - core index']
  #allocation1 [shape = 'u32[144,128]{1,0:T(1,128)}', space=vmem, size = 0x12000, scoped, tag = 'internal scratch']
  %s0 = inlined_call_operand.hbm [shape: bf16[2,8,32], index: 0, kind: input, shape index: {}]
  %s1 = inlined_call_operand.hbm [shape: bf16[32,64], index: 1, kind: input, shape index: {}]
  %s2 = inlined_call_operand.vmem [shape: f32[1,64], index: 2, kind: input, shape index: {}]
  %s3 = inlined_call_operand.hbm [shape: bf16[2,4,8,8], index: 3, kind: output, shape index: {0}]
  %s4 = inlined_call_operand.hbm [shape: bf16[2,4,8,8], index: 4, kind: output, shape index: {1}]
  %5 = xla_tuple %s3, %s4
  %s6 = sld [smem:[#allocation0]]
  $region61: #{tpu_custom_call.1} parent=0
    _
  %s8 = ssub.s32 1, %s6
  %s9 = scalar_select 0, %s8, %s6
  $region1: #{tpu_custom_call.1} parent=0
    #allocation2 [shape = 'u8[4096]{0}', space=vmem, size = 0x1000, scoped, tag = 'input window, operand 0']
    #allocation3 [shape = 's32[2]{0}', space=sflag, size = 0x8, scoped, tag = 'scoped memory for tpu_custom_call.1']
    #allocation4 [shape = 's32[2]{0}', space=sflag, size = 0x8, scoped, tag = 'scoped memory for tpu_custom_call.1']
    #allocation5 [shape = 'u8[8192]{0}', space=vmem, size = 0x2000, scoped, tag = 'input window, operand 1, single buffered']
    #allocation6 [shape = 's32[1]{0}', space=sflag, size = 0x4, scoped, tag = 'scoped memory for tpu_custom_call.1']
    #allocation7 [shape = 'u8[16384]{0}', space=vmem, size = 0x4000, scoped, tag = 'output window, operand 0']
    #allocation8 [shape = 'u8[16384]{0}', space=vmem, size = 0x4000, scoped, tag = 'output window, operand 1']
    #allocation9 [shape = 's32[2]{0}', space=sflag, size = 0x8, scoped, tag = 'scoped memory for tpu_custom_call.1']
    %10 = vsyncpa [#allocation3], 0
    %s11 = scalar_lea.sflag [#allocation3], 1
    %12 = vsyncpa %s11, 0
    %13 = vsyncpa [#allocation6], 0
    %14 = vsyncpa [#allocation4], 0
    %s15 = scalar_lea.sflag [#allocation4], 1
    %16 = vsyncpa %s15, 0
    %17 = vsyncpa [#allocation9], 0
    %s18 = scalar_lea.sflag [#allocation9], 1
    %19 = vsyncpa %s18, 0
    loop: start=0, step=1, limit=4
    $region2: #{tpu_custom_call.1} parent=1 // loop_pre_header
      _
    $region3: #{tpu_custom_call.1} parent=1 // loop_header
      %s21 = sphi 0, %s25
      %p22 = scmp.ge.s32.totalorder %s21, 4
      %s28 = sphi 0, %s40
      %s29 = sphi 0, %s36
      %s30 = sphi 0, %s28
      %s31 = sphi 0, %s29
      %s32 = sphi 0, %s30
      %s33 = sphi 0, %s31
      %s45 = sphi 0, %s47
      %s48 = sphi 0, %s45
      %s49 = sphi 0, %s48
      %s65 = sphi 0, %s49
      %s69 = sphi 0, %s69
      %s71 = sphi 0, %s69
      %s72 = sphi 0, %s71
      %s86 = sphi 0, %s72
      %s90 = sphi 0, %s90
      %s92 = sphi 0, %s90
      %s93 = sphi 0, %s92
      %s107 = sphi 0, %s93
      %s115 = sphi 0, %s117
      %s118 = sphi 0, %s115
      %s119 = sphi 0, %s118
      %s135 = sphi 0, %s119
      %s143 = sphi 0, %s145
      %s146 = sphi 0, %s143
      %s147 = sphi 0, %s146
      %s163 = sphi 0, %s147
    $region4: #{tpu_custom_call.1} parent=1 // loop_header_branch
      %24 = sbr.rel (%p22) target = $region8
    $region5: #{tpu_custom_call.1} parent=1 // loop_body
      %s26 = ssub.s32 %s21, 1
      %s27 = ssub.s32 %s21, 2
      %s34 = sadd.s32 1, %s29
      %p35 = scmp.ge.s32.totalorder %s34, 1
      %s36 = scalar_select %p35, 0, %s34
      %s37 = sadd.s32 1, %s28
      %s38 = scalar_select %p35, %s37, %s28
      %p39 = scmp.ge.s32.totalorder %s38, 2
      %s40 = scalar_select %p39, 0, %s38
      %s41 = ssub.s32 %s28, %s40
      %s42 = ssub.s32 %s29, %s36
      %s43 = sor.u32 %s41, %s42
      %p44 = scmp.eq.s32.totalorder %s43, 0
      %s46 = sadd.s32 %s45, 1
      %s47 = scalar_select %p44, %s45, %s46
      %p50 = pneg %p44
      %p51 = scmp.eq.s32.totalorder %s21, 1
      %p52 = por %p50, %p51
      %p53 = scmp.ne.s32.totalorder %s45, %s48
      %p54 = scmp.eq.s32.totalorder %s21, 0
      %p55 = por %p53, %p54
      %p56 = scmp.ne.s32.totalorder %s45, %s48
      %p57 = scmp.eq.s32.totalorder %s26, 1
      %p58 = por %p56, %p57
      %p59 = scmp.ne.s32.totalorder %s48, %s49
      %p60 = scmp.eq.s32.totalorder %s26, 0
      %p61 = por %p59, %p60
      %p62 = scmp.ne.s32.totalorder %s48, %s49
      %p63 = scmp.eq.s32.totalorder %s27, 1
      %p64 = por %p62, %p63
      %p66 = scmp.ne.s32.totalorder %s49, %s65
      %p67 = scmp.eq.s32.totalorder %s27, 0
      %p68 = por %p66, %p67
      %s70 = sadd.s32 %s69, 1
      %p73 = scmp.eq.s32.totalorder %s21, 1
      %p74 = scmp.ne.s32.totalorder %s69, %s71
      %p75 = scmp.eq.s32.totalorder %s21, 0
      %p76 = por %p74, %p75
      %p77 = scmp.ne.s32.totalorder %s69, %s71
      %p78 = scmp.eq.s32.totalorder %s26, 1
      %p79 = por %p77, %p78
      %p80 = scmp.ne.s32.totalorder %s71, %s72
      %p81 = scmp.eq.s32.totalorder %s26, 0
      %p82 = por %p80, %p81
      %p83 = scmp.ne.s32.totalorder %s71, %s72
      %p84 = scmp.eq.s32.totalorder %s27, 1
      %p85 = por %p83, %p84
      %p87 = scmp.ne.s32.totalorder %s72, %s86
      %p88 = scmp.eq.s32.totalorder %s27, 0
      %p89 = por %p87, %p88
      %s91 = sadd.s32 %s90, 1
      %p94 = scmp.eq.s32.totalorder %s21, 1
      %p95 = scmp.ne.s32.totalorder %s90, %s92
      %p96 = scmp.eq.s32.totalorder %s21, 0
      %p97 = por %p95, %p96
      %p98 = scmp.ne.s32.totalorder %s90, %s92
      %p99 = scmp.eq.s32.totalorder %s26, 1
      %p100 = por %p98, %p99
      %p101 = scmp.ne.s32.totalorder %s92, %s93
      %p102 = scmp.eq.s32.totalorder %s26, 0
      %p103 = por %p101, %p102
      %p104 = scmp.ne.s32.totalorder %s92, %s93
      %p105 = scmp.eq.s32.totalorder %s27, 1
      %p106 = por %p104, %p105
      %p108 = scmp.ne.s32.totalorder %s93, %s107
      %p109 = scmp.eq.s32.totalorder %s27, 0
      %p110 = por %p108, %p109
      %s111 = ssub.s32 %s28, %s40
      %s112 = ssub.s32 %s29, %s36
      %s113 = sor.u32 %s111, %s112
      %p114 = scmp.eq.s32.totalorder %s113, 0
      %s116 = sadd.s32 %s115, 1
      %s117 = scalar_select %p114, %s115, %s116
      %p120 = pneg %p114
      %p121 = scmp.eq.s32.totalorder %s21, 1
      %p122 = por %p120, %p121
      %p123 = scmp.ne.s32.totalorder %s115, %s118
      %p124 = scmp.eq.s32.totalorder %s21, 0
      %p125 = por %p123, %p124
      %p126 = scmp.ne.s32.totalorder %s115, %s118
      %p127 = scmp.eq.s32.totalorder %s26, 1
      %p128 = por %p126, %p127
      %p129 = scmp.ne.s32.totalorder %s118, %s119
      %p130 = scmp.eq.s32.totalorder %s26, 0
      %p131 = por %p129, %p130
      %p132 = scmp.ne.s32.totalorder %s118, %s119
      %p133 = scmp.eq.s32.totalorder %s27, 1
      %p134 = por %p132, %p133
      %p136 = scmp.ne.s32.totalorder %s119, %s135
      %p137 = scmp.eq.s32.totalorder %s27, 0
      %p138 = por %p136, %p137
      %s139 = ssub.s32 %s28, %s40
      %s140 = ssub.s32 %s29, %s36
      %s141 = sor.u32 %s139, %s140
      %p142 = scmp.eq.s32.totalorder %s141, 0
      %s144 = sadd.s32 %s143, 1
      %s145 = scalar_select %p142, %s143, %s144
      %p148 = pneg %p142
      %p149 = scmp.eq.s32.totalorder %s21, 1
      %p150 = por %p148, %p149
      %p151 = scmp.ne.s32.totalorder %s143, %s146
      %p152 = scmp.eq.s32.totalorder %s21, 0
      %p153 = por %p151, %p152
      %p154 = scmp.ne.s32.totalorder %s143, %s146
      %p155 = scmp.eq.s32.totalorder %s26, 1
      %p156 = por %p154, %p155
      %p157 = scmp.ne.s32.totalorder %s146, %s147
      %p158 = scmp.eq.s32.totalorder %s26, 0
      %p159 = por %p157, %p158
      %p160 = scmp.ne.s32.totalorder %s146, %s147
      %p161 = scmp.eq.s32.totalorder %s27, 1
      %p162 = por %p160, %p161
      %p164 = scmp.ne.s32.totalorder %s147, %s163
      %p165 = scmp.eq.s32.totalorder %s27, 0
      %p166 = por %p164, %p165
      %p167 = scmp.le.s32.totalorder 1, %s21
      %p168 = scmp.lt.s32.totalorder %s21, 3
      %p169 = pnand %p167, %p168
      %p170 = pneg %p169
      // Predicated region
      $region9: #{tpu_custom_call.1} parent=5 // pred_check
        _
      $region10: #{tpu_custom_call.1} parent=5 // pred_check_branch
        %172 = sbr.rel (%p169) target = $region12
      $region11: #{tpu_custom_call.1} parent=5 // pred_region
        %s173 = ssub.s32 %s21, 1
        // Predicated region
        $region13: #{tpu_custom_call.1} parent=11 // pred_check
          %p174 = pneg %p82
        $region14: #{tpu_custom_call.1} parent=11 // pred_check_branch
          %176 = sbr.rel (%p174) target = $region16
        $region15: #{tpu_custom_call.1} parent=11 // pred_region
          %s178 = ssub.s32 256, 256
          %179 = vsyncadd [#allocation6], %s178
          %s180 = sshll.u32 [#allocation5], 4
          %s181 = int_to_ptr.vmem [resolvable:$true] %s180
          %186 = dma.hbm_to_vmem [thread:$0]  %s1, 256, %s181, [#allocation6], 64, 64, 4
        $region16: #{tpu_custom_call.1} parent=11 // pred_fallthru
          _
        // Predicated region
        $region17: #{tpu_custom_call.1} parent=11 // pred_check
          %p187 = pneg %p103
        $region18: #{tpu_custom_call.1} parent=11 // pred_check_branch
          %189 = sbr.rel (%p187) target = $region20
        $region19: #{tpu_custom_call.1} parent=11 // pred_region
          _
        $region20: #{tpu_custom_call.1} parent=11 // pred_fallthru
          _
      $region12: #{tpu_custom_call.1} parent=5 // pred_fallthru
        _
      %p190 = scmp.lt.s32.totalorder %s21, 2
      // Predicated region
      $region21: #{tpu_custom_call.1} parent=5 // pred_check
        %p191 = pneg %p190
      $region22: #{tpu_custom_call.1} parent=5 // pred_check_branch
        %193 = sbr.rel (%p191) target = $region24
      $region23: #{tpu_custom_call.1} parent=5 // pred_region
        // Predicated region
        $region25: #{tpu_custom_call.1} parent=23 // pred_check
          %p194 = pneg %p55
        $region26: #{tpu_custom_call.1} parent=23 // pred_check_branch
          %196 = sbr.rel (%p194) target = $region28
        $region27: #{tpu_custom_call.1} parent=23 // pred_region
          %s197 = sand.u32 %s45, 1
          %s198 = scalar_lea.sflag [#allocation3], %s197
          %s199 = sand.u32 %s45, 1
          %s200 = smul.addr %s199, 4
          %s201 = scalar_lea.vmem [#allocation2], %s200
          %s203 = ssub.s32 64, 64
          %204 = vsyncadd %s198, %s203
          %s205 = sadd.s32 %s29, %s28
          %s206 = smul.addr %s205, 64
          %s207 = scalar_lea.hbm %s0, %s206
          %s209 = sshll.u32 %s201, 4
          %s210 = int_to_ptr.vmem [resolvable:$true] %s209
          %212 = dma.hbm_to_vmem [thread:$0]  %s207, 64, %s210, %s198
        $region28: #{tpu_custom_call.1} parent=23 // pred_fallthru
          _
      $region24: #{tpu_custom_call.1} parent=5 // pred_fallthru
        _
      %p213 = scmp.le.s32.totalorder 1, %s21
      %p214 = scmp.lt.s32.totalorder %s21, 3
      %p215 = pnand %p213, %p214
      %p216 = pneg %p215
      // Predicated region
      $region29: #{tpu_custom_call.1} parent=5 // pred_check
        _
      $region30: #{tpu_custom_call.1} parent=5 // pred_check_branch
        %218 = sbr.rel (%p215) target = $region32
      $region31: #{tpu_custom_call.1} parent=5 // pred_region
        %s219 = ssub.s32 %s21, 1
        %s220 = sand.u32 %s48, 1
        %s221 = scalar_lea.sflag [#allocation3], %s220
        %s222 = sand.u32 %s48, 1
        %s223 = smul.addr %s222, 4
        %s224 = scalar_lea.vmem [#allocation2], %s223
        // Predicated region
        $region33: #{tpu_custom_call.1} parent=31 // pred_check
          %p225 = pneg %p61
        $region34: #{tpu_custom_call.1} parent=31 // pred_check_branch
          %227 = sbr.rel (%p225) target = $region36
        $region35: #{tpu_custom_call.1} parent=31 // pred_region
          %228 = dma.done %s221, 64
        $region36: #{tpu_custom_call.1} parent=31 // pred_fallthru
          _
        // Predicated region
        $region37: #{tpu_custom_call.1} parent=31 // pred_check
          %p229 = pneg %p82
        $region38: #{tpu_custom_call.1} parent=31 // pred_check_branch
          %231 = sbr.rel (%p229) target = $region40
        $region39: #{tpu_custom_call.1} parent=31 // pred_region
          %232 = dma.done [#allocation6], 256
        $region40: #{tpu_custom_call.1} parent=31 // pred_fallthru
          _
        %s233 = sand.u32 %s48, 1
        %s234 = scalar_lea.sflag [#allocation3], %s233
        %s235 = sand.u32 %s48, 1
        %s236 = smul.addr %s235, 4
        %s237 = scalar_lea.vmem [#allocation2], %s236
        %p238 = pneg %p61
        %p239 = pneg %p58
        %p240 = pneg %p82
        %p241 = pneg %p79
        %p242 = pneg %p103
        %p243 = pneg %p100
        %p244 = pneg %p131
        %p245 = pneg %p128
        %s246 = sand.u32 %s118, 1
        %s247 = scalar_lea.sflag [#allocation4], %s246
        %s248 = sand.u32 %s118, 1
        %s249 = smul.addr %s248, 16
        %s250 = scalar_lea.vmem [#allocation7], %s249
        %p251 = pneg %p159
        %p252 = pneg %p156
        %s253 = sand.u32 %s146, 1
        %s254 = scalar_lea.sflag [#allocation9], %s253
        %s255 = sand.u32 %s146, 1
        %s256 = smul.addr %s255, 16
        %s257 = scalar_lea.vmem [#allocation8], %s256
        %v259 = vld [vmem:[%s224] sm:$0xf]
        %v260 = vld [vmem:[#allocation5] sm:$0xf]
        %v261 = vld [vmem:[#allocation5 + $0x4] sm:$0xf]
        %v262 = vld [vmem:[#allocation5 + $0x8] sm:$0xf]
        %v263 = vld [vmem:[#allocation5 + $0xc] sm:$0xf]
        %v264 = vld [vmem:[%s2] sm:$0x1]
        %v266 = vlaneseq
        %v267 = vshrl.u32 %v266, 7
        %v268 = vsub.s32 0, %v267
        %v269 = vrot.slane %v264, %v268
        %v275 = vunpack.c.l.b16 %v260
        %v276 = vunpack.c.l.b16 %v261
        %v277 = vunpack.c.l.b16 %v262
        %v278 = vunpack.c.l.b16 %v263
        %v279 = vpack.c.b16 %v276, %v275
        %v280 = vpack.c.b16 %v278, %v277
        %vm283 = vcmask 261120
        %v285 = vsel %vm283, %v259, 0
        %287 = vmatprep.subr.bf16.mxu0 0
        %288 = vmatpush1.bf16.msra.mxu0 %v279
        %289 = vmatprep.subr.bf16.mxu0 0
        %290 = vmatpush1.bf16.msra.mxu0 %v280
        %291 = vmatprep.subr.bf16.mxu0 0
        %292 = vmatpush1.bf16.msra.mxu0 0
        %293 = vmatprep.subr.bf16.mxu0 0
        %294 = vmatpush1.bf16.msra.mxu0 0
        %295 = vmatprep.subr.bf16.mxu0 0
        %296 = vmatpush1.bf16.msra.mxu0 0
        %297 = vmatprep.subr.bf16.mxu0 0
        %298 = vmatpush1.bf16.msra.mxu0 0
        %299 = vmatprep.subr.bf16.mxu0 0
        %300 = vmatpush1.bf16.msra.mxu0 0
        %301 = vmatprep.subr.bf16.mxu0 0
        %302 = vmatpush1.bf16.msra.mxu0 0
        %303 = vmatprep.subr.bf16.mxu0 0
        %304 = vmatpush1.bf16.msra.mxu0 0
        %305 = vmatprep.subr.bf16.mxu0 0
        %306 = vmatpush1.bf16.msra.mxu0 0
        %307 = vmatprep.subr.bf16.mxu0 0
        %308 = vmatpush1.bf16.msra.mxu0 0
        %309 = vmatprep.subr.bf16.mxu0 0
        %310 = vmatpush1.bf16.msra.mxu0 0
        %311 = vmatprep.subr.bf16.mxu0 0
        %312 = vmatpush1.bf16.msra.mxu0 0
        %313 = vmatprep.subr.bf16.mxu0 0
        %314 = vmatpush1.bf16.msra.mxu0 0
        %315 = vmatprep.subr.bf16.mxu0 0
        %316 = vmatpush1.bf16.msra.mxu0 0
        %317 = vmatprep.subr.bf16.mxu0 0
        %318 = vmatpush1.bf16.msra.mxu0 0
        %319 = vmatprep.mubr.bf16.mxu0 0
        %320 = vmatmul.mubr.bf16.gmra.mrb[0].mxu0 %v285
        %v321 = vpop.f32.mrb[0].mxu0
        %v322 = vadd.f32 %v269, %v321
        %v323 = vpop.f32.mrb[0].mxu0
        %v324 = vpop.f32.mrb[0].mxu0
        %v325 = vpop.f32.mrb[0].mxu0
        %326 = vdwg.mxu0
        %328 = vrot.lane.b32.xlu0 %v322, 120
        %v329 = vpop.permute.xlu0 %328
        %331 = vrot.lane.b32.xlu0 %v322, 112
        %v332 = vpop.permute.xlu0 %331
        %334 = vrot.lane.b32.xlu0 %v322, 104
        %v335 = vpop.permute.xlu0 %334
        %v337 = vcombine.low %v322, %v332
        %v338 = vcombine.high %v322, %v332
        %v340 = vunpack.c.l.s4 1983009808
        %v341 = vunpack.c.0.s8 %v340
        %v342 = vlaneseq
        %v343 = vshrl.u32 %v342, 7
        %v344 = vsub.s32 %v341, %v343
        %v345 = vrot.slane %v337, %v344
        %v347 = vunpack.c.l.s4 1983009808
        %v348 = vunpack.c.0.s8 %v347
        %v349 = vlaneseq
        %v350 = vshrl.u32 %v349, 7
        %v351 = vsub.s32 %v348, %v350
        %v352 = vrot.slane %v338, %v351
        %v353 = vcombine.low %v329, %v335
        %v354 = vcombine.high %v329, %v335
        %v356 = vunpack.c.l.s4 1983009808
        %v357 = vunpack.c.0.s8 %v356
        %v358 = vlaneseq
        %v359 = vshrl.u32 %v358, 7
        %v360 = vsub.s32 %v357, %v359
        %v361 = vrot.slane %v353, %v360
        %v363 = vunpack.c.l.s4 1983009808
        %v364 = vunpack.c.0.s8 %v363
        %v365 = vlaneseq
        %v366 = vshrl.u32 %v365, 7
        %v367 = vsub.s32 %v364, %v366
        %v368 = vrot.slane %v354, %v367
        %v369 = vcombine.low %v345, %v361
        %v370 = vcombine.high %v345, %v361
        %v372 = vunpack.c.l.s4 1934713408
        %v373 = vunpack.c.0.s8 %v372
        %v374 = vlaneseq
        %v375 = vshrl.u32 %v374, 7
        %v376 = vsub.s32 %v373, %v375
        %v377 = vrot.slane %v369, %v376
        %v379 = vunpack.c.l.s4 1934713408
        %v380 = vunpack.c.0.s8 %v379
        %v381 = vlaneseq
        %v382 = vshrl.u32 %v381, 7
        %v383 = vsub.s32 %v380, %v382
        %v384 = vrot.slane %v370, %v383
        %v385 = vcombine.low %v352, %v368
        %v386 = vcombine.high %v352, %v368
        %v388 = vunpack.c.l.s4 1934713408
        %v389 = vunpack.c.0.s8 %v388
        %v390 = vlaneseq
        %v391 = vshrl.u32 %v390, 7
        %v392 = vsub.s32 %v389, %v391
        %v393 = vrot.slane %v385, %v392
        %v395 = vunpack.c.l.s4 1934713408
        %v396 = vunpack.c.0.s8 %v395
        %v397 = vlaneseq
        %v398 = vshrl.u32 %v397, 7
        %v399 = vsub.s32 %v396, %v398
        %v400 = vrot.slane %v386, %v399
        %v401 = vcombine.high %v377, 0.0
        %v402 = vcombine.high %v384, 0.0
        %v403 = vcombine.high %v393, 0.0
        %v404 = vcombine.high %v400, 0.0
        %405 = vrot.lane.b32.xlu0 %v322, 96
        %v406 = vpop.permute.xlu0 %405
        %407 = vrot.lane.b32.xlu0 %v329, 96
        %v408 = vpop.permute.xlu0 %407
        %409 = vrot.lane.b32.xlu0 %v332, 96
        %v410 = vpop.permute.xlu0 %409
        %411 = vrot.lane.b32.xlu0 %v335, 96
        %v412 = vpop.permute.xlu0 %411
        %v417 = vcombine.low %v406, %v410
        %v418 = vcombine.high %v406, %v410
        %v420 = vunpack.c.l.s4 1983009808
        %v421 = vunpack.c.0.s8 %v420
        %v422 = vlaneseq
        %v423 = vshrl.u32 %v422, 7
        %v424 = vsub.s32 %v421, %v423
        %v425 = vrot.slane %v417, %v424
        %v427 = vunpack.c.l.s4 1983009808
        %v428 = vunpack.c.0.s8 %v427
        %v429 = vlaneseq
        %v430 = vshrl.u32 %v429, 7
        %v431 = vsub.s32 %v428, %v430
        %v432 = vrot.slane %v418, %v431
        %v433 = vcombine.low %v408, %v412
        %v434 = vcombine.high %v408, %v412
        %v436 = vunpack.c.l.s4 1983009808
        %v437 = vunpack.c.0.s8 %v436
        %v438 = vlaneseq
        %v439 = vshrl.u32 %v438, 7
        %v440 = vsub.s32 %v437, %v439
        %v441 = vrot.slane %v433, %v440
        %v443 = vunpack.c.l.s4 1983009808
        %v444 = vunpack.c.0.s8 %v443
        %v445 = vlaneseq
        %v446 = vshrl.u32 %v445, 7
        %v447 = vsub.s32 %v444, %v446
        %v448 = vrot.slane %v434, %v447
        %v449 = vcombine.low %v425, %v441
        %v450 = vcombine.high %v425, %v441
        %v452 = vunpack.c.l.s4 1934713408
        %v453 = vunpack.c.0.s8 %v452
        %v454 = vlaneseq
        %v455 = vshrl.u32 %v454, 7
        %v456 = vsub.s32 %v453, %v455
        %v457 = vrot.slane %v449, %v456
        %v459 = vunpack.c.l.s4 1934713408
        %v460 = vunpack.c.0.s8 %v459
        %v461 = vlaneseq
        %v462 = vshrl.u32 %v461, 7
        %v463 = vsub.s32 %v460, %v462
        %v464 = vrot.slane %v450, %v463
        %v465 = vcombine.low %v432, %v448
        %v466 = vcombine.high %v432, %v448
        %v468 = vunpack.c.l.s4 1934713408
        %v469 = vunpack.c.0.s8 %v468
        %v470 = vlaneseq
        %v471 = vshrl.u32 %v470, 7
        %v472 = vsub.s32 %v469, %v471
        %v473 = vrot.slane %v465, %v472
        %v475 = vunpack.c.l.s4 1934713408
        %v476 = vunpack.c.0.s8 %v475
        %v477 = vlaneseq
        %v478 = vshrl.u32 %v477, 7
        %v479 = vsub.s32 %v476, %v478
        %v480 = vrot.slane %v466, %v479
        %v481 = vcombine.high %v457, 0.0
        %v482 = vcombine.high %v464, 0.0
        %v483 = vcombine.high %v473, 0.0
        %v484 = vcombine.high %v480, 0.0
        %485 = vxpose.xlu0.b32.start [1/16] %v377, 128
        %486 = vxpose.xlu0.b32.cont [2/16] 0.0, 128
        %487 = vxpose.xlu0.b32.cont [3/16] 0.0, 128
        %488 = vxpose.xlu0.b32.cont [4/16] 0.0, 128
        %489 = vxpose.xlu0.b32.cont [5/16] 0.0, 128
        %490 = vxpose.xlu0.b32.cont [6/16] 0.0, 128
        %491 = vxpose.xlu0.b32.cont [7/16] 0.0, 128
        %492 = vxpose.xlu0.b32.cont [8/16] 0.0, 128
        %493 = vxpose.xlu0.b32.cont [9/16] 0.0, 128
        %494 = vxpose.xlu0.b32.cont [10/16] 0.0, 128
        %495 = vxpose.xlu0.b32.cont [11/16] 0.0, 128
        %496 = vxpose.xlu0.b32.cont [12/16] 0.0, 128
        %497 = vxpose.xlu0.b32.cont [13/16] 0.0, 128
        %498 = vxpose.xlu0.b32.cont [14/16] 0.0, 128
        %499 = vxpose.xlu0.b32.cont [15/16] 0.0, 128
        %500 = vxpose.xlu0.b32.end [16/16] 0.0, 128
        %v501 = vpop.trf.xlu0
        %v502 = vpop.trf.xlu0
        %v503 = vpop.trf.xlu0
        %v504 = vpop.trf.xlu0
        %v505 = vpop.trf.xlu0
        %v506 = vpop.trf.xlu0
        %v507 = vpop.trf.xlu0
        %v508 = vpop.trf.xlu0
        %v509 = vpop.trf.xlu0
        %v510 = vpop.trf.xlu0
        %v511 = vpop.trf.xlu0
        %v512 = vpop.trf.xlu0
        %v513 = vpop.trf.xlu0
        %v514 = vpop.trf.xlu0
        %v515 = vpop.trf.xlu0
        %v516 = vpop.trf.xlu0
        %517 = vxpose.xlu0.b32.start [1/16] %v401, 128
        %518 = vxpose.xlu0.b32.cont [2/16] 0.0, 128
        %519 = vxpose.xlu0.b32.cont [3/16] 0.0, 128
        %520 = vxpose.xlu0.b32.cont [4/16] 0.0, 128
        %521 = vxpose.xlu0.b32.cont [5/16] 0.0, 128
        %522 = vxpose.xlu0.b32.cont [6/16] 0.0, 128
        %523 = vxpose.xlu0.b32.cont [7/16] 0.0, 128
        %524 = vxpose.xlu0.b32.cont [8/16] 0.0, 128
        %525 = vxpose.xlu0.b32.cont [9/16] 0.0, 128
        %526 = vxpose.xlu0.b32.cont [10/16] 0.0, 128
        %527 = vxpose.xlu0.b32.cont [11/16] 0.0, 128
        %528 = vxpose.xlu0.b32.cont [12/16] 0.0, 128
        %529 = vxpose.xlu0.b32.cont [13/16] 0.0, 128
        %530 = vxpose.xlu0.b32.cont [14/16] 0.0, 128
        %531 = vxpose.xlu0.b32.cont [15/16] 0.0, 128
        %532 = vxpose.xlu0.b32.end [16/16] 0.0, 128
        %v533 = vpop.trf.xlu0
        %v534 = vpop.trf.xlu0
        %v535 = vpop.trf.xlu0
        %v536 = vpop.trf.xlu0
        %v537 = vpop.trf.xlu0
        %v538 = vpop.trf.xlu0
        %v539 = vpop.trf.xlu0
        %v540 = vpop.trf.xlu0
        %v541 = vpop.trf.xlu0
        %v542 = vpop.trf.xlu0
        %v543 = vpop.trf.xlu0
        %v544 = vpop.trf.xlu0
        %v545 = vpop.trf.xlu0
        %v546 = vpop.trf.xlu0
        %v547 = vpop.trf.xlu0
        %v548 = vpop.trf.xlu0
        %549 = vxpose.xlu0.b32.start [1/16] %v384, 128
        %550 = vxpose.xlu0.b32.cont [2/16] 0.0, 128
        %551 = vxpose.xlu0.b32.cont [3/16] 0.0, 128
        %552 = vxpose.xlu0.b32.cont [4/16] 0.0, 128
        %553 = vxpose.xlu0.b32.cont [5/16] 0.0, 128
        %554 = vxpose.xlu0.b32.cont [6/16] 0.0, 128
        %555 = vxpose.xlu0.b32.cont [7/16] 0.0, 128
        %556 = vxpose.xlu0.b32.cont [8/16] 0.0, 128
        %557 = vxpose.xlu0.b32.cont [9/16] 0.0, 128
        %558 = vxpose.xlu0.b32.cont [10/16] 0.0, 128
        %559 = vxpose.xlu0.b32.cont [11/16] 0.0, 128
        %560 = vxpose.xlu0.b32.cont [12/16] 0.0, 128
        %561 = vxpose.xlu0.b32.cont [13/16] 0.0, 128
        %562 = vxpose.xlu0.b32.cont [14/16] 0.0, 128
        %563 = vxpose.xlu0.b32.cont [15/16] 0.0, 128
        %564 = vxpose.xlu0.b32.end [16/16] 0.0, 128
        %v565 = vpop.trf.xlu0
        %v566 = vpop.trf.xlu0
        %v567 = vpop.trf.xlu0
        %v568 = vpop.trf.xlu0
        %v569 = vpop.trf.xlu0
        %v570 = vpop.trf.xlu0
        %v571 = vpop.trf.xlu0
        %v572 = vpop.trf.xlu0
        %v573 = vpop.trf.xlu0
        %v574 = vpop.trf.xlu0
        %v575 = vpop.trf.xlu0
        %v576 = vpop.trf.xlu0
        %v577 = vpop.trf.xlu0
        %v578 = vpop.trf.xlu0
        %v579 = vpop.trf.xlu0
        %v580 = vpop.trf.xlu0
        %581 = vxpose.xlu0.b32.start [1/16] %v402, 128
        %582 = vxpose.xlu0.b32.cont [2/16] 0.0, 128
        %583 = vxpose.xlu0.b32.cont [3/16] 0.0, 128
        %584 = vxpose.xlu0.b32.cont [4/16] 0.0, 128
        %585 = vxpose.xlu0.b32.cont [5/16] 0.0, 128
        %586 = vxpose.xlu0.b32.cont [6/16] 0.0, 128
        %587 = vxpose.xlu0.b32.cont [7/16] 0.0, 128
        %588 = vxpose.xlu0.b32.cont [8/16] 0.0, 128
        %589 = vxpose.xlu0.b32.cont [9/16] 0.0, 128
        %590 = vxpose.xlu0.b32.cont [10/16] 0.0, 128
        %591 = vxpose.xlu0.b32.cont [11/16] 0.0, 128
        %592 = vxpose.xlu0.b32.cont [12/16] 0.0, 128
        %593 = vxpose.xlu0.b32.cont [13/16] 0.0, 128
        %594 = vxpose.xlu0.b32.cont [14/16] 0.0, 128
        %595 = vxpose.xlu0.b32.cont [15/16] 0.0, 128
        %596 = vxpose.xlu0.b32.end [16/16] 0.0, 128
        %v597 = vpop.trf.xlu0
        %v598 = vpop.trf.xlu0
        %v599 = vpop.trf.xlu0
        %v600 = vpop.trf.xlu0
        %v601 = vpop.trf.xlu0
        %v602 = vpop.trf.xlu0
        %v603 = vpop.trf.xlu0
        %v604 = vpop.trf.xlu0
        %v605 = vpop.trf.xlu0
        %v606 = vpop.trf.xlu0
        %v607 = vpop.trf.xlu0
        %v608 = vpop.trf.xlu0
        %v609 = vpop.trf.xlu0
        %v610 = vpop.trf.xlu0
        %v611 = vpop.trf.xlu0
        %v612 = vpop.trf.xlu0
        %613 = vxpose.xlu0.b32.start [1/16] %v393, 128
        %614 = vxpose.xlu0.b32.cont [2/16] 0.0, 128
        %615 = vxpose.xlu0.b32.cont [3/16] 0.0, 128
        %616 = vxpose.xlu0.b32.cont [4/16] 0.0, 128
        %617 = vxpose.xlu0.b32.cont [5/16] 0.0, 128
        %618 = vxpose.xlu0.b32.cont [6/16] 0.0, 128
        %619 = vxpose.xlu0.b32.cont [7/16] 0.0, 128
        %620 = vxpose.xlu0.b32.cont [8/16] 0.0, 128
        %621 = vxpose.xlu0.b32.cont [9/16] 0.0, 128
        %622 = vxpose.xlu0.b32.cont [10/16] 0.0, 128
        %623 = vxpose.xlu0.b32.cont [11/16] 0.0, 128
        %624 = vxpose.xlu0.b32.cont [12/16] 0.0, 128
        %625 = vxpose.xlu0.b32.cont [13/16] 0.0, 128
        %626 = vxpose.xlu0.b32.cont [14/16] 0.0, 128
        %627 = vxpose.xlu0.b32.cont [15/16] 0.0, 128
        %628 = vxpose.xlu0.b32.end [16/16] 0.0, 128
        %v629 = vpop.trf.xlu0
        %v630 = vpop.trf.xlu0
        %v631 = vpop.trf.xlu0
        %v632 = vpop.trf.xlu0
        %v633 = vpop.trf.xlu0
        %v634 = vpop.trf.xlu0
        %v635 = vpop.trf.xlu0
        %v636 = vpop.trf.xlu0
        %v637 = vpop.trf.xlu0
        %v638 = vpop.trf.xlu0
        %v639 = vpop.trf.xlu0
        %v640 = vpop.trf.xlu0
        %v641 = vpop.trf.xlu0
        %v642 = vpop.trf.xlu0
        %v643 = vpop.trf.xlu0
        %v644 = vpop.trf.xlu0
        %645 = vxpose.xlu0.b32.start [1/16] %v403, 128
        %646 = vxpose.xlu0.b32.cont [2/16] 0.0, 128
        %647 = vxpose.xlu0.b32.cont [3/16] 0.0, 128
        %648 = vxpose.xlu0.b32.cont [4/16] 0.0, 128
        %649 = vxpose.xlu0.b32.cont [5/16] 0.0, 128
        %650 = vxpose.xlu0.b32.cont [6/16] 0.0, 128
        %651 = vxpose.xlu0.b32.cont [7/16] 0.0, 128
        %652 = vxpose.xlu0.b32.cont [8/16] 0.0, 128
        %653 = vxpose.xlu0.b32.cont [9/16] 0.0, 128
        %654 = vxpose.xlu0.b32.cont [10/16] 0.0, 128
        %655 = vxpose.xlu0.b32.cont [11/16] 0.0, 128
        %656 = vxpose.xlu0.b32.cont [12/16] 0.0, 128
        %657 = vxpose.xlu0.b32.cont [13/16] 0.0, 128
        %658 = vxpose.xlu0.b32.cont [14/16] 0.0, 128
        %659 = vxpose.xlu0.b32.cont [15/16] 0.0, 128
        %660 = vxpose.xlu0.b32.end [16/16] 0.0, 128
        %v661 = vpop.trf.xlu0
        %v662 = vpop.trf.xlu0
        %v663 = vpop.trf.xlu0
        %v664 = vpop.trf.xlu0
        %v665 = vpop.trf.xlu0
        %v666 = vpop.trf.xlu0
        %v667 = vpop.trf.xlu0
        %v668 = vpop.trf.xlu0
        %v669 = vpop.trf.xlu0
        %v670 = vpop.trf.xlu0
        %v671 = vpop.trf.xlu0
        %v672 = vpop.trf.xlu0
        %v673 = vpop.trf.xlu0
        %v674 = vpop.trf.xlu0
        %v675 = vpop.trf.xlu0
        %v676 = vpop.trf.xlu0
        %677 = vxpose.xlu0.b32.start [1/16] %v400, 128
        %678 = vxpose.xlu0.b32.cont [2/16] 0.0, 128
        %679 = vxpose.xlu0.b32.cont [3/16] 0.0, 128
        %680 = vxpose.xlu0.b32.cont [4/16] 0.0, 128
        %681 = vxpose.xlu0.b32.cont [5/16] 0.0, 128
        %682 = vxpose.xlu0.b32.cont [6/16] 0.0, 128
        %683 = vxpose.xlu0.b32.cont [7/16] 0.0, 128
        %684 = vxpose.xlu0.b32.cont [8/16] 0.0, 128
        %685 = vxpose.xlu0.b32.cont [9/16] 0.0, 128
        %686 = vxpose.xlu0.b32.cont [10/16] 0.0, 128
        %687 = vxpose.xlu0.b32.cont [11/16] 0.0, 128
        %688 = vxpose.xlu0.b32.cont [12/16] 0.0, 128
        %689 = vxpose.xlu0.b32.cont [13/16] 0.0, 128
        %690 = vxpose.xlu0.b32.cont [14/16] 0.0, 128
        %691 = vxpose.xlu0.b32.cont [15/16] 0.0, 128
        %692 = vxpose.xlu0.b32.end [16/16] 0.0, 128
        %v693 = vpop.trf.xlu0
        %v694 = vpop.trf.xlu0
        %v695 = vpop.trf.xlu0
        %v696 = vpop.trf.xlu0
        %v697 = vpop.trf.xlu0
        %v698 = vpop.trf.xlu0
        %v699 = vpop.trf.xlu0
        %v700 = vpop.trf.xlu0
        %v701 = vpop.trf.xlu0
        %v702 = vpop.trf.xlu0
        %v703 = vpop.trf.xlu0
        %v704 = vpop.trf.xlu0
        %v705 = vpop.trf.xlu0
        %v706 = vpop.trf.xlu0
        %v707 = vpop.trf.xlu0
        %v708 = vpop.trf.xlu0
        %709 = vxpose.xlu0.b32.start [1/16] %v404, 128
        %710 = vxpose.xlu0.b32.cont [2/16] 0.0, 128
        %711 = vxpose.xlu0.b32.cont [3/16] 0.0, 128
        %712 = vxpose.xlu0.b32.cont [4/16] 0.0, 128
        %713 = vxpose.xlu0.b32.cont [5/16] 0.0, 128
        %714 = vxpose.xlu0.b32.cont [6/16] 0.0, 128
        %715 = vxpose.xlu0.b32.cont [7/16] 0.0, 128
        %716 = vxpose.xlu0.b32.cont [8/16] 0.0, 128
        %717 = vxpose.xlu0.b32.cont [9/16] 0.0, 128
        %718 = vxpose.xlu0.b32.cont [10/16] 0.0, 128
        %719 = vxpose.xlu0.b32.cont [11/16] 0.0, 128
        %720 = vxpose.xlu0.b32.cont [12/16] 0.0, 128
        %721 = vxpose.xlu0.b32.cont [13/16] 0.0, 128
        %722 = vxpose.xlu0.b32.cont [14/16] 0.0, 128
        %723 = vxpose.xlu0.b32.cont [15/16] 0.0, 128
        %724 = vxpose.xlu0.b32.end [16/16] 0.0, 128
        %v725 = vpop.trf.xlu0
        %v726 = vpop.trf.xlu0
        %v727 = vpop.trf.xlu0
        %v728 = vpop.trf.xlu0
        %v729 = vpop.trf.xlu0
        %v730 = vpop.trf.xlu0
        %v731 = vpop.trf.xlu0
        %v732 = vpop.trf.xlu0
        %v733 = vpop.trf.xlu0
        %v734 = vpop.trf.xlu0
        %v735 = vpop.trf.xlu0
        %v736 = vpop.trf.xlu0
        %v737 = vpop.trf.xlu0
        %v738 = vpop.trf.xlu0
        %v739 = vpop.trf.xlu0
        %v740 = vpop.trf.xlu0
        %v741 = vcombine.low %v501, %v565
        %v742 = vcombine.high %v501, %v565
        %v744 = vunpack.c.l.s4 1983009808
        %v745 = vunpack.c.0.s8 %v744
        %v746 = vlaneseq
        %v747 = vshrl.u32 %v746, 7
        %v748 = vsub.s32 %v745, %v747
        %v749 = vrot.slane %v741, %v748
        %v751 = vunpack.c.l.s4 1983009808
        %v752 = vunpack.c.0.s8 %v751
        %v753 = vlaneseq
        %v754 = vshrl.u32 %v753, 7
        %v755 = vsub.s32 %v752, %v754
        %v756 = vrot.slane %v742, %v755
        %v757 = vcombine.low %v533, %v597
        %v758 = vcombine.high %v533, %v597
        %v760 = vunpack.c.l.s4 1983009808
        %v761 = vunpack.c.0.s8 %v760
        %v762 = vlaneseq
        %v763 = vshrl.u32 %v762, 7
        %v764 = vsub.s32 %v761, %v763
        %v765 = vrot.slane %v757, %v764
        %v767 = vunpack.c.l.s4 1983009808
        %v768 = vunpack.c.0.s8 %v767
        %v769 = vlaneseq
        %v770 = vshrl.u32 %v769, 7
        %v771 = vsub.s32 %v768, %v770
        %v772 = vrot.slane %v758, %v771
        %v773 = vcombine.low %v629, %v693
        %v774 = vcombine.high %v629, %v693
        %v776 = vunpack.c.l.s4 1983009808
        %v777 = vunpack.c.0.s8 %v776
        %v778 = vlaneseq
        %v779 = vshrl.u32 %v778, 7
        %v780 = vsub.s32 %v777, %v779
        %v781 = vrot.slane %v773, %v780
        %v783 = vunpack.c.l.s4 1983009808
        %v784 = vunpack.c.0.s8 %v783
        %v785 = vlaneseq
        %v786 = vshrl.u32 %v785, 7
        %v787 = vsub.s32 %v784, %v786
        %v788 = vrot.slane %v774, %v787
        %v789 = vcombine.low %v661, %v725
        %v790 = vcombine.high %v661, %v725
        %v792 = vunpack.c.l.s4 1983009808
        %v793 = vunpack.c.0.s8 %v792
        %v794 = vlaneseq
        %v795 = vshrl.u32 %v794, 7
        %v796 = vsub.s32 %v793, %v795
        %v797 = vrot.slane %v789, %v796
        %v799 = vunpack.c.l.s4 1983009808
        %v800 = vunpack.c.0.s8 %v799
        %v801 = vlaneseq
        %v802 = vshrl.u32 %v801, 7
        %v803 = vsub.s32 %v800, %v802
        %v804 = vrot.slane %v790, %v803
        %v805 = vcombine.low %v749, %v765
        %v806 = vcombine.high %v749, %v765
        %v808 = vunpack.c.l.s4 1934713408
        %v809 = vunpack.c.0.s8 %v808
        %v810 = vlaneseq
        %v811 = vshrl.u32 %v810, 7
        %v812 = vsub.s32 %v809, %v811
        %v813 = vrot.slane %v805, %v812
        %v815 = vunpack.c.l.s4 1934713408
        %v816 = vunpack.c.0.s8 %v815
        %v817 = vlaneseq
        %v818 = vshrl.u32 %v817, 7
        %v819 = vsub.s32 %v816, %v818
        %v820 = vrot.slane %v806, %v819
        %v821 = vcombine.low %v756, %v772
        %v822 = vcombine.high %v756, %v772
        %v824 = vunpack.c.l.s4 1934713408
        %v825 = vunpack.c.0.s8 %v824
        %v826 = vlaneseq
        %v827 = vshrl.u32 %v826, 7
        %v828 = vsub.s32 %v825, %v827
        %v829 = vrot.slane %v821, %v828
        %v831 = vunpack.c.l.s4 1934713408
        %v832 = vunpack.c.0.s8 %v831
        %v833 = vlaneseq
        %v834 = vshrl.u32 %v833, 7
        %v835 = vsub.s32 %v832, %v834
        %v836 = vrot.slane %v822, %v835
        %v837 = vcombine.low %v781, %v797
        %v838 = vcombine.high %v781, %v797
        %v840 = vunpack.c.l.s4 1934713408
        %v841 = vunpack.c.0.s8 %v840
        %v842 = vlaneseq
        %v843 = vshrl.u32 %v842, 7
        %v844 = vsub.s32 %v841, %v843
        %v845 = vrot.slane %v837, %v844
        %v847 = vunpack.c.l.s4 1934713408
        %v848 = vunpack.c.0.s8 %v847
        %v849 = vlaneseq
        %v850 = vshrl.u32 %v849, 7
        %v851 = vsub.s32 %v848, %v850
        %v852 = vrot.slane %v838, %v851
        %v853 = vcombine.low %v788, %v804
        %v854 = vcombine.high %v788, %v804
        %v856 = vunpack.c.l.s4 1934713408
        %v857 = vunpack.c.0.s8 %v856
        %v858 = vlaneseq
        %v859 = vshrl.u32 %v858, 7
        %v860 = vsub.s32 %v857, %v859
        %v861 = vrot.slane %v853, %v860
        %v863 = vunpack.c.l.s4 1934713408
        %v864 = vunpack.c.0.s8 %v863
        %v865 = vlaneseq
        %v866 = vshrl.u32 %v865, 7
        %v867 = vsub.s32 %v864, %v866
        %v868 = vrot.slane %v854, %v867
        %v869 = vcombine.low %v813, %v845
        %v870 = vcombine.high %v813, %v845
        %v871 = vcombine.low %v820, %v852
        %v872 = vcombine.high %v820, %v852
        %v873 = vcombine.low %v829, %v861
        %v874 = vcombine.high %v829, %v861
        %v875 = vcombine.low %v836, %v868
        %v876 = vcombine.high %v836, %v868
        %877 = vxpose.xlu0.b32.start [1/16] %v869, 128
        %878 = vxpose.xlu0.b32.cont [2/16] 0.0, 128
        %879 = vxpose.xlu0.b32.cont [3/16] 0.0, 128
        %880 = vxpose.xlu0.b32.cont [4/16] 0.0, 128
        %881 = vxpose.xlu0.b32.cont [5/16] 0.0, 128
        %882 = vxpose.xlu0.b32.cont [6/16] 0.0, 128
        %883 = vxpose.xlu0.b32.cont [7/16] 0.0, 128
        %884 = vxpose.xlu0.b32.cont [8/16] 0.0, 128
        %885 = vxpose.xlu0.b32.cont [9/16] 0.0, 128
        %886 = vxpose.xlu0.b32.cont [10/16] 0.0, 128
        %887 = vxpose.xlu0.b32.cont [11/16] 0.0, 128
        %888 = vxpose.xlu0.b32.cont [12/16] 0.0, 128
        %889 = vxpose.xlu0.b32.cont [13/16] 0.0, 128
        %890 = vxpose.xlu0.b32.cont [14/16] 0.0, 128
        %891 = vxpose.xlu0.b32.cont [15/16] 0.0, 128
        %892 = vxpose.xlu0.b32.end [16/16] 0.0, 128
        %v893 = vpop.trf.xlu0
        %v894 = vpop.trf.xlu0
        %v895 = vpop.trf.xlu0
        %v896 = vpop.trf.xlu0
        %v897 = vpop.trf.xlu0
        %v898 = vpop.trf.xlu0
        %v899 = vpop.trf.xlu0
        %v900 = vpop.trf.xlu0
        %v901 = vpop.trf.xlu0
        %v902 = vpop.trf.xlu0
        %v903 = vpop.trf.xlu0
        %v904 = vpop.trf.xlu0
        %v905 = vpop.trf.xlu0
        %v906 = vpop.trf.xlu0
        %v907 = vpop.trf.xlu0
        %v908 = vpop.trf.xlu0
        %909 = vxpose.xlu0.b32.start [1/16] %v870, 128
        %910 = vxpose.xlu0.b32.cont [2/16] 0.0, 128
        %911 = vxpose.xlu0.b32.cont [3/16] 0.0, 128
        %912 = vxpose.xlu0.b32.cont [4/16] 0.0, 128
        %913 = vxpose.xlu0.b32.cont [5/16] 0.0, 128
        %914 = vxpose.xlu0.b32.cont [6/16] 0.0, 128
        %915 = vxpose.xlu0.b32.cont [7/16] 0.0, 128
        %916 = vxpose.xlu0.b32.cont [8/16] 0.0, 128
        %917 = vxpose.xlu0.b32.cont [9/16] 0.0, 128
        %918 = vxpose.xlu0.b32.cont [10/16] 0.0, 128
        %919 = vxpose.xlu0.b32.cont [11/16] 0.0, 128
        %920 = vxpose.xlu0.b32.cont [12/16] 0.0, 128
        %921 = vxpose.xlu0.b32.cont [13/16] 0.0, 128
        %922 = vxpose.xlu0.b32.cont [14/16] 0.0, 128
        %923 = vxpose.xlu0.b32.cont [15/16] 0.0, 128
        %924 = vxpose.xlu0.b32.end [16/16] 0.0, 128
        %v925 = vpop.trf.xlu0
        %v926 = vpop.trf.xlu0
        %v927 = vpop.trf.xlu0
        %v928 = vpop.trf.xlu0
        %v929 = vpop.trf.xlu0
        %v930 = vpop.trf.xlu0
        %v931 = vpop.trf.xlu0
        %v932 = vpop.trf.xlu0
        %v933 = vpop.trf.xlu0
        %v934 = vpop.trf.xlu0
        %v935 = vpop.trf.xlu0
        %v936 = vpop.trf.xlu0
        %v937 = vpop.trf.xlu0
        %v938 = vpop.trf.xlu0
        %v939 = vpop.trf.xlu0
        %v940 = vpop.trf.xlu0
        %941 = vxpose.xlu0.b32.start [1/16] %v871, 128
        %942 = vxpose.xlu0.b32.cont [2/16] 0.0, 128
        %943 = vxpose.xlu0.b32.cont [3/16] 0.0, 128
        %944 = vxpose.xlu0.b32.cont [4/16] 0.0, 128
        %945 = vxpose.xlu0.b32.cont [5/16] 0.0, 128
        %946 = vxpose.xlu0.b32.cont [6/16] 0.0, 128
        %947 = vxpose.xlu0.b32.cont [7/16] 0.0, 128
        %948 = vxpose.xlu0.b32.cont [8/16] 0.0, 128
        %949 = vxpose.xlu0.b32.cont [9/16] 0.0, 128
        %950 = vxpose.xlu0.b32.cont [10/16] 0.0, 128
        %951 = vxpose.xlu0.b32.cont [11/16] 0.0, 128
        %952 = vxpose.xlu0.b32.cont [12/16] 0.0, 128
        %953 = vxpose.xlu0.b32.cont [13/16] 0.0, 128
        %954 = vxpose.xlu0.b32.cont [14/16] 0.0, 128
        %955 = vxpose.xlu0.b32.cont [15/16] 0.0, 128
        %956 = vxpose.xlu0.b32.end [16/16] 0.0, 128
        %v957 = vpop.trf.xlu0
        %v958 = vpop.trf.xlu0
        %v959 = vpop.trf.xlu0
        %v960 = vpop.trf.xlu0
        %v961 = vpop.trf.xlu0
        %v962 = vpop.trf.xlu0
        %v963 = vpop.trf.xlu0
        %v964 = vpop.trf.xlu0
        %v965 = vpop.trf.xlu0
        %v966 = vpop.trf.xlu0
        %v967 = vpop.trf.xlu0
        %v968 = vpop.trf.xlu0
        %v969 = vpop.trf.xlu0
        %v970 = vpop.trf.xlu0
        %v971 = vpop.trf.xlu0
        %v972 = vpop.trf.xlu0
        %973 = vxpose.xlu0.b32.start [1/16] %v872, 128
        %974 = vxpose.xlu0.b32.cont [2/16] 0.0, 128
        %975 = vxpose.xlu0.b32.cont [3/16] 0.0, 128
        %976 = vxpose.xlu0.b32.cont [4/16] 0.0, 128
        %977 = vxpose.xlu0.b32.cont [5/16] 0.0, 128
        %978 = vxpose.xlu0.b32.cont [6/16] 0.0, 128
        %979 = vxpose.xlu0.b32.cont [7/16] 0.0, 128
        %980 = vxpose.xlu0.b32.cont [8/16] 0.0, 128
        %981 = vxpose.xlu0.b32.cont [9/16] 0.0, 128
        %982 = vxpose.xlu0.b32.cont [10/16] 0.0, 128
        %983 = vxpose.xlu0.b32.cont [11/16] 0.0, 128
        %984 = vxpose.xlu0.b32.cont [12/16] 0.0, 128
        %985 = vxpose.xlu0.b32.cont [13/16] 0.0, 128
        %986 = vxpose.xlu0.b32.cont [14/16] 0.0, 128
        %987 = vxpose.xlu0.b32.cont [15/16] 0.0, 128
        %988 = vxpose.xlu0.b32.end [16/16] 0.0, 128
        %v989 = vpop.trf.xlu0
        %v990 = vpop.trf.xlu0
        %v991 = vpop.trf.xlu0
        %v992 = vpop.trf.xlu0
        %v993 = vpop.trf.xlu0
        %v994 = vpop.trf.xlu0
        %v995 = vpop.trf.xlu0
        %v996 = vpop.trf.xlu0
        %v997 = vpop.trf.xlu0
        %v998 = vpop.trf.xlu0
        %v999 = vpop.trf.xlu0
        %v1000 = vpop.trf.xlu0
        %v1001 = vpop.trf.xlu0
        %v1002 = vpop.trf.xlu0
        %v1003 = vpop.trf.xlu0
        %v1004 = vpop.trf.xlu0
        %1005 = vxpose.xlu0.b32.start [1/16] %v873, 128
        %1006 = vxpose.xlu0.b32.cont [2/16] 0.0, 128
        %1007 = vxpose.xlu0.b32.cont [3/16] 0.0, 128
        %1008 = vxpose.xlu0.b32.cont [4/16] 0.0, 128
        %1009 = vxpose.xlu0.b32.cont [5/16] 0.0, 128
        %1010 = vxpose.xlu0.b32.cont [6/16] 0.0, 128
        %1011 = vxpose.xlu0.b32.cont [7/16] 0.0, 128
        %1012 = vxpose.xlu0.b32.cont [8/16] 0.0, 128
        %1013 = vxpose.xlu0.b32.cont [9/16] 0.0, 128
        %1014 = vxpose.xlu0.b32.cont [10/16] 0.0, 128
        %1015 = vxpose.xlu0.b32.cont [11/16] 0.0, 128
        %1016 = vxpose.xlu0.b32.cont [12/16] 0.0, 128
        %1017 = vxpose.xlu0.b32.cont [13/16] 0.0, 128
        %1018 = vxpose.xlu0.b32.cont [14/16] 0.0, 128
        %1019 = vxpose.xlu0.b32.cont [15/16] 0.0, 128
        %1020 = vxpose.xlu0.b32.end [16/16] 0.0, 128
        %v1021 = vpop.trf.xlu0
        %v1022 = vpop.trf.xlu0
        %v1023 = vpop.trf.xlu0
        %v1024 = vpop.trf.xlu0
        %v1025 = vpop.trf.xlu0
        %v1026 = vpop.trf.xlu0
        %v1027 = vpop.trf.xlu0
        %v1028 = vpop.trf.xlu0
        %v1029 = vpop.trf.xlu0
        %v1030 = vpop.trf.xlu0
        %v1031 = vpop.trf.xlu0
        %v1032 = vpop.trf.xlu0
        %v1033 = vpop.trf.xlu0
        %v1034 = vpop.trf.xlu0
        %v1035 = vpop.trf.xlu0
        %v1036 = vpop.trf.xlu0
        %1037 = vxpose.xlu0.b32.start [1/16] %v874, 128
        %1038 = vxpose.xlu0.b32.cont [2/16] 0.0, 128
        %1039 = vxpose.xlu0.b32.cont [3/16] 0.0, 128
        %1040 = vxpose.xlu0.b32.cont [4/16] 0.0, 128
        %1041 = vxpose.xlu0.b32.cont [5/16] 0.0, 128
        %1042 = vxpose.xlu0.b32.cont [6/16] 0.0, 128
        %1043 = vxpose.xlu0.b32.cont [7/16] 0.0, 128
        %1044 = vxpose.xlu0.b32.cont [8/16] 0.0, 128
        %1045 = vxpose.xlu0.b32.cont [9/16] 0.0, 128
        %1046 = vxpose.xlu0.b32.cont [10/16] 0.0, 128
        %1047 = vxpose.xlu0.b32.cont [11/16] 0.0, 128
        %1048 = vxpose.xlu0.b32.cont [12/16] 0.0, 128
        %1049 = vxpose.xlu0.b32.cont [13/16] 0.0, 128
        %1050 = vxpose.xlu0.b32.cont [14/16] 0.0, 128
        %1051 = vxpose.xlu0.b32.cont [15/16] 0.0, 128
        %1052 = vxpose.xlu0.b32.end [16/16] 0.0, 128
        %v1053 = vpop.trf.xlu0
        %v1054 = vpop.trf.xlu0
        %v1055 = vpop.trf.xlu0
        %v1056 = vpop.trf.xlu0
        %v1057 = vpop.trf.xlu0
        %v1058 = vpop.trf.xlu0
        %v1059 = vpop.trf.xlu0
        %v1060 = vpop.trf.xlu0
        %v1061 = vpop.trf.xlu0
        %v1062 = vpop.trf.xlu0
        %v1063 = vpop.trf.xlu0
        %v1064 = vpop.trf.xlu0
        %v1065 = vpop.trf.xlu0
        %v1066 = vpop.trf.xlu0
        %v1067 = vpop.trf.xlu0
        %v1068 = vpop.trf.xlu0
        %1069 = vxpose.xlu0.b32.start [1/16] %v875, 128
        %1070 = vxpose.xlu0.b32.cont [2/16] 0.0, 128
        %1071 = vxpose.xlu0.b32.cont [3/16] 0.0, 128
        %1072 = vxpose.xlu0.b32.cont [4/16] 0.0, 128
        %1073 = vxpose.xlu0.b32.cont [5/16] 0.0, 128
        %1074 = vxpose.xlu0.b32.cont [6/16] 0.0, 128
        %1075 = vxpose.xlu0.b32.cont [7/16] 0.0, 128
        %1076 = vxpose.xlu0.b32.cont [8/16] 0.0, 128
        %1077 = vxpose.xlu0.b32.cont [9/16] 0.0, 128
        %1078 = vxpose.xlu0.b32.cont [10/16] 0.0, 128
        %1079 = vxpose.xlu0.b32.cont [11/16] 0.0, 128
        %1080 = vxpose.xlu0.b32.cont [12/16] 0.0, 128
        %1081 = vxpose.xlu0.b32.cont [13/16] 0.0, 128
        %1082 = vxpose.xlu0.b32.cont [14/16] 0.0, 128
        %1083 = vxpose.xlu0.b32.cont [15/16] 0.0, 128
        %1084 = vxpose.xlu0.b32.end [16/16] 0.0, 128
        %v1085 = vpop.trf.xlu0
        %v1086 = vpop.trf.xlu0
        %v1087 = vpop.trf.xlu0
        %v1088 = vpop.trf.xlu0
        %v1089 = vpop.trf.xlu0
        %v1090 = vpop.trf.xlu0
        %v1091 = vpop.trf.xlu0
        %v1092 = vpop.trf.xlu0
        %v1093 = vpop.trf.xlu0
        %v1094 = vpop.trf.xlu0
        %v1095 = vpop.trf.xlu0
        %v1096 = vpop.trf.xlu0
        %v1097 = vpop.trf.xlu0
        %v1098 = vpop.trf.xlu0
        %v1099 = vpop.trf.xlu0
        %v1100 = vpop.trf.xlu0
        %1101 = vxpose.xlu0.b32.start [1/16] %v876, 128
        %1102 = vxpose.xlu0.b32.cont [2/16] 0.0, 128
        %1103 = vxpose.xlu0.b32.cont [3/16] 0.0, 128
        %1104 = vxpose.xlu0.b32.cont [4/16] 0.0, 128
        %1105 = vxpose.xlu0.b32.cont [5/16] 0.0, 128
        %1106 = vxpose.xlu0.b32.cont [6/16] 0.0, 128
        %1107 = vxpose.xlu0.b32.cont [7/16] 0.0, 128
        %1108 = vxpose.xlu0.b32.cont [8/16] 0.0, 128
        %1109 = vxpose.xlu0.b32.cont [9/16] 0.0, 128
        %1110 = vxpose.xlu0.b32.cont [10/16] 0.0, 128
        %1111 = vxpose.xlu0.b32.cont [11/16] 0.0, 128
        %1112 = vxpose.xlu0.b32.cont [12/16] 0.0, 128
        %1113 = vxpose.xlu0.b32.cont [13/16] 0.0, 128
        %1114 = vxpose.xlu0.b32.cont [14/16] 0.0, 128
        %1115 = vxpose.xlu0.b32.cont [15/16] 0.0, 128
        %1116 = vxpose.xlu0.b32.end [16/16] 0.0, 128
        %v1117 = vpop.trf.xlu0
        %v1118 = vpop.trf.xlu0
        %v1119 = vpop.trf.xlu0
        %v1120 = vpop.trf.xlu0
        %v1121 = vpop.trf.xlu0
        %v1122 = vpop.trf.xlu0
        %v1123 = vpop.trf.xlu0
        %v1124 = vpop.trf.xlu0
        %v1125 = vpop.trf.xlu0
        %v1126 = vpop.trf.xlu0
        %v1127 = vpop.trf.xlu0
        %v1128 = vpop.trf.xlu0
        %v1129 = vpop.trf.xlu0
        %v1130 = vpop.trf.xlu0
        %v1131 = vpop.trf.xlu0
        %v1132 = vpop.trf.xlu0
        %v1133 = vcombine.low %v893, %v957
        %v1135 = vunpack.c.l.s4 1983009808
        %v1136 = vunpack.c.0.s8 %v1135
        %v1137 = vlaneseq
        %v1138 = vshrl.u32 %v1137, 7
        %v1139 = vsub.s32 %v1136, %v1138
        %v1140 = vrot.slane %v1133, %v1139
        %v1141 = vcombine.low %v925, %v989
        %v1143 = vunpack.c.l.s4 1983009808
        %v1144 = vunpack.c.0.s8 %v1143
        %v1145 = vlaneseq
        %v1146 = vshrl.u32 %v1145, 7
        %v1147 = vsub.s32 %v1144, %v1146
        %v1148 = vrot.slane %v1141, %v1147
        %v1149 = vcombine.low %v1021, %v1085
        %v1151 = vunpack.c.l.s4 1983009808
        %v1152 = vunpack.c.0.s8 %v1151
        %v1153 = vlaneseq
        %v1154 = vshrl.u32 %v1153, 7
        %v1155 = vsub.s32 %v1152, %v1154
        %v1156 = vrot.slane %v1149, %v1155
        %v1157 = vcombine.low %v1053, %v1117
        %v1159 = vunpack.c.l.s4 1983009808
        %v1160 = vunpack.c.0.s8 %v1159
        %v1161 = vlaneseq
        %v1162 = vshrl.u32 %v1161, 7
        %v1163 = vsub.s32 %v1160, %v1162
        %v1164 = vrot.slane %v1157, %v1163
        %v1165 = vcombine.low %v1140, %v1148
        %v1166 = vcombine.high %v1140, %v1148
        %v1168 = vunpack.c.l.s4 1934713408
        %v1169 = vunpack.c.0.s8 %v1168
        %v1170 = vlaneseq
        %v1171 = vshrl.u32 %v1170, 7
        %v1172 = vsub.s32 %v1169, %v1171
        %v1173 = vrot.slane %v1165, %v1172
        %v1175 = vunpack.c.l.s4 1934713408
        %v1176 = vunpack.c.0.s8 %v1175
        %v1177 = vlaneseq
        %v1178 = vshrl.u32 %v1177, 7
        %v1179 = vsub.s32 %v1176, %v1178
        %v1180 = vrot.slane %v1166, %v1179
        %v1181 = vcombine.low %v1156, %v1164
        %v1182 = vcombine.high %v1156, %v1164
        %v1184 = vunpack.c.l.s4 1934713408
        %v1185 = vunpack.c.0.s8 %v1184
        %v1186 = vlaneseq
        %v1187 = vshrl.u32 %v1186, 7
        %v1188 = vsub.s32 %v1185, %v1187
        %v1189 = vrot.slane %v1181, %v1188
        %v1191 = vunpack.c.l.s4 1934713408
        %v1192 = vunpack.c.0.s8 %v1191
        %v1193 = vlaneseq
        %v1194 = vshrl.u32 %v1193, 7
        %v1195 = vsub.s32 %v1192, %v1194
        %v1196 = vrot.slane %v1182, %v1195
        %v1197 = vcombine.low %v1173, %v1189
        %v1198 = vcombine.high %v1173, %v1189
        %v1199 = vcombine.low %v1180, %v1196
        %v1200 = vcombine.high %v1180, %v1196
        %v1201 = vpack.c.bf16 %v1197, %v1197
        %v1202 = vpack.c.bf16 %v1198, %v1198
        %v1203 = vpack.c.bf16 %v1199, %v1199
        %v1204 = vpack.c.bf16 %v1200, %v1200
        %vm1205 = vcmask 60416
        %1206 = vst.msk [vmem:[%s250] sm:$0xf] %vm1205, %v1201
        %1207 = vst.msk [vmem:[%s250 + $0x4] sm:$0xf] %vm1205, %v1202
        %1208 = vst.msk [vmem:[%s250 + $0x8] sm:$0xf] %vm1205, %v1203
        %1209 = vst.msk [vmem:[%s250 + $0xc] sm:$0xf] %vm1205, %v1204
        %v1210 = vcombine.low %v457, %v464
        %v1212 = vunpack.c.l.s4 1983009808
        %v1213 = vunpack.c.0.s8 %v1212
        %v1214 = vlaneseq
        %v1215 = vshrl.u32 %v1214, 7
        %v1216 = vsub.s32 %v1213, %v1215
        %v1217 = vrot.slane %v1210, %v1216
        %v1218 = vcombine.low %v481, %v482
        %v1220 = vunpack.c.l.s4 1983009808
        %v1221 = vunpack.c.0.s8 %v1220
        %v1222 = vlaneseq
        %v1223 = vshrl.u32 %v1222, 7
        %v1224 = vsub.s32 %v1221, %v1223
        %v1225 = vrot.slane %v1218, %v1224
        %v1226 = vcombine.low %v473, %v480
        %v1228 = vunpack.c.l.s4 1983009808
        %v1229 = vunpack.c.0.s8 %v1228
        %v1230 = vlaneseq
        %v1231 = vshrl.u32 %v1230, 7
        %v1232 = vsub.s32 %v1229, %v1231
        %v1233 = vrot.slane %v1226, %v1232
        %v1234 = vcombine.low %v483, %v484
        %v1236 = vunpack.c.l.s4 1983009808
        %v1237 = vunpack.c.0.s8 %v1236
        %v1238 = vlaneseq
        %v1239 = vshrl.u32 %v1238, 7
        %v1240 = vsub.s32 %v1237, %v1239
        %v1241 = vrot.slane %v1234, %v1240
        %v1242 = vcombine.low %v1217, %v1225
        %v1243 = vcombine.high %v1217, %v1225
        %v1245 = vunpack.c.l.s4 1934713408
        %v1246 = vunpack.c.0.s8 %v1245
        %v1247 = vlaneseq
        %v1248 = vshrl.u32 %v1247, 7
        %v1249 = vsub.s32 %v1246, %v1248
        %v1250 = vrot.slane %v1242, %v1249
        %v1252 = vunpack.c.l.s4 1934713408
        %v1253 = vunpack.c.0.s8 %v1252
        %v1254 = vlaneseq
        %v1255 = vshrl.u32 %v1254, 7
        %v1256 = vsub.s32 %v1253, %v1255
        %v1257 = vrot.slane %v1243, %v1256
        %v1258 = vcombine.low %v1233, %v1241
        %v1259 = vcombine.high %v1233, %v1241
        %v1261 = vunpack.c.l.s4 1934713408
        %v1262 = vunpack.c.0.s8 %v1261
        %v1263 = vlaneseq
        %v1264 = vshrl.u32 %v1263, 7
        %v1265 = vsub.s32 %v1262, %v1264
        %v1266 = vrot.slane %v1258, %v1265
        %v1268 = vunpack.c.l.s4 1934713408
        %v1269 = vunpack.c.0.s8 %v1268
        %v1270 = vlaneseq
        %v1271 = vshrl.u32 %v1270, 7
        %v1272 = vsub.s32 %v1269, %v1271
        %v1273 = vrot.slane %v1259, %v1272
        %v1274 = vcombine.low %v1250, %v1266
        %v1275 = vcombine.high %v1250, %v1266
        %v1276 = vcombine.low %v1257, %v1273
        %v1277 = vcombine.high %v1257, %v1273
        %v1278 = vpack.c.bf16 %v1274, %v1274
        %v1279 = vpack.c.bf16 %v1275, %v1275
        %v1280 = vpack.c.bf16 %v1276, %v1276
        %v1281 = vpack.c.bf16 %v1277, %v1277
        %1282 = vst.msk [vmem:[%s257] sm:$0xf] %vm1205, %v1278
        %1283 = vst.msk [vmem:[%s257 + $0x4] sm:$0xf] %vm1205, %v1279
        %1284 = vst.msk [vmem:[%s257 + $0x8] sm:$0xf] %vm1205, %v1280
        %1285 = vst.msk [vmem:[%s257 + $0xc] sm:$0xf] %vm1205, %v1281
        %s1286 = sand.u32 %s118, 1
        %s1287 = scalar_lea.sflag [#allocation4], %s1286
        %s1288 = sand.u32 %s118, 1
        %s1289 = smul.addr %s1288, 16
        %s1290 = scalar_lea.vmem [#allocation7], %s1289
        %s1291 = sand.u32 %s146, 1
        %s1292 = scalar_lea.sflag [#allocation9], %s1291
        %s1293 = sand.u32 %s146, 1
        %s1294 = smul.addr %s1293, 16
        %s1295 = scalar_lea.vmem [#allocation8], %s1294
        // Predicated region
        $region41: #{tpu_custom_call.1} parent=31 // pred_check
          %p1296 = pneg %p128
        $region42: #{tpu_custom_call.1} parent=31 // pred_check_branch
          %1298 = sbr.rel (%p1296) target = $region44
        $region43: #{tpu_custom_call.1} parent=31 // pred_region
          %s1300 = ssub.s32 256, 256
          %1301 = vsyncadd %s1287, %s1300
          %s1302 = smul.addr %s30, 4
          %s1303 = sadd.s32 %s31, %s1302
          %s1304 = smul.addr %s1303, 64
          %s1305 = scalar_lea.hbm %s3, %s1304
          %s1306 = sshll.u32 %s1290, 4
          %s1307 = int_to_ptr.vmem [resolvable:$true] %s1306
          %1312 = dma.vmem_to_hbm [thread:$0]  %s1307, 256, %s1305, %s1287, 64, 64, 4
        $region44: #{tpu_custom_call.1} parent=31 // pred_fallthru
          _
        // Predicated region
        $region45: #{tpu_custom_call.1} parent=31 // pred_check
          %p1313 = pneg %p156
        $region46: #{tpu_custom_call.1} parent=31 // pred_check_branch
          %1315 = sbr.rel (%p1313) target = $region48
        $region47: #{tpu_custom_call.1} parent=31 // pred_region
          %s1317 = ssub.s32 256, 256
          %1318 = vsyncadd %s1292, %s1317
          %s1319 = smul.addr %s30, 4
          %s1320 = sadd.s32 %s31, %s1319
          %s1321 = smul.addr %s1320, 64
          %s1322 = scalar_lea.hbm %s4, %s1321
          %s1323 = sshll.u32 %s1295, 4
          %s1324 = int_to_ptr.vmem [resolvable:$true] %s1323
          %1329 = dma.vmem_to_hbm [thread:$0]  %s1324, 256, %s1322, %s1292, 64, 64, 4
        $region48: #{tpu_custom_call.1} parent=31 // pred_fallthru
          _
      $region32: #{tpu_custom_call.1} parent=5 // pred_fallthru
        _
      %p1330 = scmp.le.s32.totalorder 2, %s21
      // Predicated region
      $region49: #{tpu_custom_call.1} parent=5 // pred_check
        %p1331 = pneg %p1330
      $region50: #{tpu_custom_call.1} parent=5 // pred_check_branch
        %1333 = sbr.rel (%p1331) target = $region52
      $region51: #{tpu_custom_call.1} parent=5 // pred_region
        %s1334 = ssub.s32 %s21, 2
        // Predicated region
        $region53: #{tpu_custom_call.1} parent=51 // pred_check
          %p1335 = pneg %p134
        $region54: #{tpu_custom_call.1} parent=51 // pred_check_branch
          %1337 = sbr.rel (%p1335) target = $region56
        $region55: #{tpu_custom_call.1} parent=51 // pred_region
          %s1338 = sand.u32 %s119, 1
          %s1339 = scalar_lea.sflag [#allocation4], %s1338
          %s1340 = sand.u32 %s119, 1
          %s1341 = smul.addr %s1340, 16
          %s1342 = scalar_lea.vmem [#allocation7], %s1341
          %1343 = dma.done %s1339, 256
        $region56: #{tpu_custom_call.1} parent=51 // pred_fallthru
          _
        // Predicated region
        $region57: #{tpu_custom_call.1} parent=51 // pred_check
          %p1344 = pneg %p162
        $region58: #{tpu_custom_call.1} parent=51 // pred_check_branch
          %1346 = sbr.rel (%p1344) target = $region60
        $region59: #{tpu_custom_call.1} parent=51 // pred_region
          %s1347 = sand.u32 %s147, 1
          %s1348 = scalar_lea.sflag [#allocation9], %s1347
          %s1349 = sand.u32 %s147, 1
          %s1350 = smul.addr %s1349, 16
          %s1351 = scalar_lea.vmem [#allocation8], %s1350
          %1352 = dma.done %s1348, 256
        $region60: #{tpu_custom_call.1} parent=51 // pred_fallthru
          _
      $region52: #{tpu_custom_call.1} parent=5 // pred_fallthru
        _
    $region6: #{tpu_custom_call.1} parent=1 // loop_footer
      %s25 = sadd.s32 1, %s21
    $region7: #{tpu_custom_call.1} parent=1 // loop_footer_branch
      %20 = sbr.rel target = $region3
    $region8: #{tpu_custom_call.1} parent=1 // loop_exit
      _
    %1353 = vsyncpa [#allocation3], 1
    %s1354 = scalar_lea.sflag [#allocation3], 1
    %1355 = vsyncpa %s1354, 1
    %1356 = vsyncpa [#allocation6], 1
    %1357 = vsyncpa [#allocation4], 1
    %s1358 = scalar_lea.sflag [#allocation4], 1
    %1359 = vsyncpa %s1358, 1
    %1360 = vsyncpa [#allocation9], 1
    %s1361 = scalar_lea.sflag [#allocation9], 1
    %1362 = vsyncpa %s1361, 1

</llo_original>
